<compile_context>
chip_gen: v6e
topology: v6e:2x2x1
jax: 0.10.0
libtpu: 0.0.40
codegen_flags: <defaults>
</compile_context>

<pallas_src>
import functools
import math

import jax
import jax.numpy as jnp
from jax import lax
from jax.experimental import pallas as pl
from jax.experimental.pallas import tpu as pltpu

N_PAD = 8     # node dim padded to the f32 sublane count
F_PAD = 128   # feature dim padded to the lane width -> lane-dense loads/stores


def _fused_gcn_kernel(x_ref, at_ref,
                      w1_ref, b1_ref, p1_ref,
                      w2_ref, b2_ref, p2_ref,
                      w3_ref, b3_ref,
                      o_ref, *, n, k1, k2):
    """conv1+relu -> pool1 -> conv2+relu -> pool2 -> conv3, all resident in VMEM."""
    f32 = jnp.float32
    N = at_ref.shape[0]
    row_i = lax.broadcasted_iota(jnp.int32, (N, N), 0)       # sublane (row) index
    col_i = lax.broadcasted_iota(jnp.int32, (N, N), 1)       # lane (col) index
    eye = (row_i == col_i).astype(f32)
    node_col = lax.broadcasted_iota(jnp.int32, (N, 1), 0)    # node id, column oriented

    def gcn(at, n_valid, x, w, b, relu):
        # at[dst, src] = A^T entry; add self-loops on the valid nodes only.
        valid = (node_col < n_valid).astype(f32)                    # (N, 1)
        at_hat = at + eye * valid
        deg = jnp.sum(at_hat, axis=1, keepdims=True)                # (N, 1) in-degree
        dinv = jnp.where(deg > 0, lax.rsqrt(deg), 0.0)              # (N, 1)
        # Same vector lane-oriented: diag-place + sublane reduce (avoids a sub-tile transpose).
        dinv_row = jnp.sum(eye * dinv, axis=0, keepdims=True)       # (1, N)
        at_norm = dinv * at_hat * dinv_row                          # D^-1/2 A_hat^T D^-1/2
        xw = jnp.dot(x, w, preferred_element_type=f32)              # (N, F)
        out = jnp.dot(at_norm, xw, preferred_element_type=f32) + b
        return jnp.maximum(out, 0.0) if relu else out

    def pool(h, at, n_valid, k, p_unit):
        # p_unit = p / max(||p||, eps) is pre-normalized in the (jitted) wrapper.
        score = jnp.tanh(jnp.sum(h * p_unit, axis=1, keepdims=True))     # (N, 1)
        valid = node_col < n_valid
        s_col = jnp.where(valid, score, -2.0)    # tanh in (-1,1) => -2 < every valid score
        s_row = jnp.sum(eye * s_col, axis=0, keepdims=True)              # (1, N)
        # beats[i, j] = node i ranked before node j (higher score; ties -> lower index)
        beats = (s_col > s_row) | ((s_col == s_row) & (row_i < col_i))
        rank_row = jnp.sum(beats.astype(f32), axis=0, keepdims=True)     # (1, N) rank of node j
        rank_col = jnp.sum(eye * rank_row, axis=1, keepdims=True)        # (N, 1) same, col oriented
        # Selection / permutation matrices: P[r, j] = 1 iff rank[j] == r and r < k.
        perm = ((rank_row == row_i.astype(f32)) & (row_i < k)).astype(f32)    # P
        perm_t = ((rank_col == col_i.astype(f32)) & (col_i < k)).astype(f32)  # P^T
        h_new = jnp.dot(perm, h * score, preferred_element_type=f32)     # rows >= k are zero
        at_new = jnp.dot(perm, jnp.dot(at, perm_t, preferred_element_type=f32),
                         preferred_element_type=f32)                     # P AT P^T
        return h_new, at_new

    at0 = at_ref[...]
    h = gcn(at0, n, x_ref[...], w1_ref[...], b1_ref[...], relu=True)
    h, at1 = pool(h, at0, n, k1, p1_ref[...])
    h = gcn(at1, k1, h, w2_ref[...], b2_ref[...], relu=True)
    h, at2 = pool(h, at1, k1, k2, p2_ref[...])
    o_ref[...] = gcn(at2, k2, h, w3_ref[...], b3_ref[...], relu=False)


def _pad2d(a, shape):
    out = jnp.zeros(shape, jnp.float32)
    return out.at[: a.shape[0], : a.shape[1]].set(a.astype(jnp.float32))


@jax.jit
def advanced_gcn_forward(x, edge_index, params):
    """x: (n, in_ch) float32, edge_index: (2, E) int32, single graph (batch all zero)."""
    n = x.shape[0]
    out_ch = params["w3"].shape[1]
    k1 = int(math.ceil(0.5 * n))          # TopKPooling ratio 0.5 (shapes are static)
    k2 = int(math.ceil(0.5 * k1))

    # Dense adjacency built directly target-major: AT[dst, src] += 1  (duplicate edges sum,
    # matching PyG's per-edge unit weights). No XLA transpose, single (N,N) kernel input.
    at = jnp.zeros((N_PAD, N_PAD), jnp.float32).at[edge_index[1], edge_index[0]].add(1.0)
    x_pad = _pad2d(x, (N_PAD, F_PAD))

    def unit(p):  # hoisted score normalization p / ||p|| (clamped against ||p|| == 0)
        return (p / jnp.maximum(jnp.linalg.norm(p), 1e-12)).reshape(1, -1)

    args = (
        x_pad, at,
        _pad2d(params["w1"], (F_PAD, F_PAD)),
        _pad2d(params["b1"].reshape(1, -1), (1, F_PAD)),
        _pad2d(unit(params["p1"]), (1, F_PAD)),
        _pad2d(params["w2"], (F_PAD, F_PAD)),
        _pad2d(params["b2"].reshape(1, -1), (1, F_PAD)),
        _pad2d(unit(params["p2"]), (1, F_PAD)),
        _pad2d(params["w3"], (F_PAD, F_PAD)),
        _pad2d(params["b3"].reshape(1, -1), (1, F_PAD)),
    )
    kernel = functools.partial(_fused_gcn_kernel, n=n, k1=k1, k2=k2)
    out = pl.pallas_call(
        kernel,
        out_shape=jax.ShapeDtypeStruct((N_PAD, F_PAD), jnp.float32),   # lane-dense slab
        in_specs=[pl.BlockSpec(memory_space=pltpu.MemorySpace.VMEM)] * len(args),
        out_specs=pl.BlockSpec(memory_space=pltpu.MemorySpace.VMEM),
    )(*args)
    # TODO(synk): if batches of graphs are ever processed, add a leading "parallel" grid
    # axis (block-diagonal or per-graph blocks) so the MXU/vregs are actually filled.
    return out[:k2, :out_ch]   # (n_final, out_channels)


if __name__ == "__main__":
    in_channels, hidden_channels, out_channels = 3, 32, 8

    # Inputs exactly as in the reference module (single graph, batch = zeros).
    x = jnp.array(
        [[1, 2, 3], [4, 5, 6], [7, 8, 9], [10, 11, 12], [13, 14, 15]],
        dtype=jnp.float32,
    )
    edge_index = jnp.array([[0, 1, 2, 3], [1, 2, 3, 4]], dtype=jnp.int32)

    # Deterministic parameter init (synthetic; shapes from the module's __init__).
    key = jax.random.PRNGKey(0)
    ks = jax.random.split(key, 8)
    scale = 0.1
    params = {
        "w1": scale * jax.random.normal(ks[0], (in_channels, hidden_channels), jnp.float32),
        "b1": scale * jax.random.normal(ks[1], (hidden_channels,), jnp.float32),
        "p1": scale * jax.random.normal(ks[2], (hidden_channels,), jnp.float32),
        "w2": scale * jax.random.normal(ks[3], (hidden_channels, hidden_channels), jnp.float32),
        "b2": scale * jax.random.normal(ks[4], (hidden_channels,), jnp.float32),
        "p2": scale * jax.random.normal(ks[5], (hidden_channels,), jnp.float32),
        "w3": scale * jax.random.normal(ks[6], (hidden_channels, out_channels), jnp.float32),
        "b3": scale * jax.random.normal(ks[7], (out_channels,), jnp.float32),
    }

    out = jax.block_until_ready(advanced_gcn_forward(x, edge_index, params))
    assert out.shape == (2, out_channels), out.shape   # ceil(0.5*ceil(0.5*5)) = 2 nodes
    assert bool(jnp.all(jnp.isfinite(out)))
    print("KERNEL_OK")
</pallas_src>

<mosaic_0001>
module attributes {stable_mosaic.version = 11 : i64} {
  func.func @_fused_gcn_kernel(%arg0: memref<8x128xf32, #tpu.memory_space<vmem>>, %arg1: memref<8x8xf32, #tpu.memory_space<vmem>>, %arg2: memref<128x128xf32, #tpu.memory_space<vmem>>, %arg3: memref<1x128xf32, #tpu.memory_space<vmem>>, %arg4: memref<1x128xf32, #tpu.memory_space<vmem>>, %arg5: memref<128x128xf32, #tpu.memory_space<vmem>>, %arg6: memref<1x128xf32, #tpu.memory_space<vmem>>, %arg7: memref<1x128xf32, #tpu.memory_space<vmem>>, %arg8: memref<128x128xf32, #tpu.memory_space<vmem>>, %arg9: memref<1x128xf32, #tpu.memory_space<vmem>>, %arg10: memref<8x128xf32, #tpu.memory_space<vmem>>) attributes {dimension_semantics = [], scalar_prefetch = 0 : i64, scratch_operands = 0 : i64, tpu.core_type = #tpu.core_type<tc>} {
    %0 = tpu.iota {dimensions = array<i32: 0>} : vector<8x8xi32>
    %1 = tpu.iota {dimensions = array<i32: 1>} : vector<8x8xi32>
    %2 = arith.cmpi eq, %0, %1 : vector<8x8xi32>
    %3 = arith.extui %2 : vector<8x8xi1> to vector<8x8xi32>
    %4 = arith.sitofp %3 : vector<8x8xi32> to vector<8x8xf32>
    %5 = tpu.iota {dimensions = array<i32: 0>} : vector<8x1xi32>
    %c0 = arith.constant 0 : index
    %c0_0 = arith.constant 0 : index
    %6 = vector.load %arg1[%c0, %c0_0] : memref<8x8xf32, #tpu.memory_space<vmem>>, vector<8x8xf32>
    %c0_1 = arith.constant 0 : index
    %c0_2 = arith.constant 0 : index
    %7 = vector.load %arg0[%c0_1, %c0_2] : memref<8x128xf32, #tpu.memory_space<vmem>>, vector<8x128xf32>
    %c0_3 = arith.constant 0 : index
    %c0_4 = arith.constant 0 : index
    %8 = vector.load %arg2[%c0_3, %c0_4] : memref<128x128xf32, #tpu.memory_space<vmem>>, vector<128x128xf32>
    %c0_5 = arith.constant 0 : index
    %c0_6 = arith.constant 0 : index
    %9 = vector.load %arg3[%c0_5, %c0_6] : memref<1x128xf32, #tpu.memory_space<vmem>>, vector<1x128xf32>
    %c5_i32 = arith.constant 5 : i32
    %10 = vector.broadcast %c5_i32 : i32 to vector<8x1xi32>
    %11 = arith.cmpi slt, %5, %10 : vector<8x1xi32>
    %12 = arith.extui %11 : vector<8x1xi1> to vector<8x1xi32>
    %13 = arith.sitofp %12 : vector<8x1xi32> to vector<8x1xf32>
    %14 = vector.broadcast %13 : vector<8x1xf32> to vector<8x8xf32>
    %15 = arith.mulf %4, %14 : vector<8x8xf32>
    %16 = arith.addf %6, %15 : vector<8x8xf32>
    %cst = arith.constant dense<0.000000e+00> : vector<8xf32>
    %17 = vector.multi_reduction <add>, %16, %cst [1] : vector<8x8xf32> to vector<8xf32>
    %18 = vector.shape_cast %17 : vector<8xf32> to vector<8x1xf32>
    %cst_7 = arith.constant 0.000000e+00 : f32
    %19 = vector.broadcast %cst_7 : f32 to vector<8x1xf32>
    %20 = arith.cmpf ogt, %18, %19 : vector<8x1xf32>
    %21 = math.rsqrt %18 : vector<8x1xf32>
    %cst_8 = arith.constant 0.000000e+00 : f32
    %22 = vector.broadcast %cst_8 : f32 to vector<8x1xf32>
    %23 = arith.select %20, %21, %22 : vector<8x1xi1>, vector<8x1xf32>
    %24 = vector.broadcast %23 : vector<8x1xf32> to vector<8x8xf32>
    %25 = arith.mulf %4, %24 : vector<8x8xf32>
    %cst_9 = arith.constant dense<0.000000e+00> : vector<8xf32>
    %26 = vector.multi_reduction <add>, %25, %cst_9 [0] : vector<8x8xf32> to vector<8xf32>
    %27 = vector.shape_cast %26 : vector<8xf32> to vector<1x8xf32>
    %28 = vector.broadcast %23 : vector<8x1xf32> to vector<8x8xf32>
    %29 = arith.mulf %28, %16 : vector<8x8xf32>
    %30 = vector.broadcast %27 : vector<1x8xf32> to vector<8x8xf32>
    %31 = arith.mulf %29, %30 : vector<8x8xf32>
    %cst_10 = arith.constant dense<0.000000e+00> : vector<8x128xf32>
    %32 = tpu.matmul %7, %8, %cst_10 {dimension_numbers = #tpu.dot_dimension_numbers<[1], [0], [0], [1], [0, 0, 1, 1], [], []>} : vector<8x128xf32>, vector<128x128xf32>, vector<8x128xf32> -> vector<8x128xf32>
    %cst_11 = arith.constant dense<0.000000e+00> : vector<8x128xf32>
    %33 = tpu.matmul %31, %32, %cst_11 {dimension_numbers = #tpu.dot_dimension_numbers<[1], [0], [0], [1], [0, 0, 1, 1], [], []>} : vector<8x8xf32>, vector<8x128xf32>, vector<8x128xf32> -> vector<8x128xf32>
    %34 = vector.broadcast %9 : vector<1x128xf32> to vector<8x128xf32>
    %35 = arith.addf %33, %34 : vector<8x128xf32>
    %cst_12 = arith.constant 0.000000e+00 : f32
    %36 = vector.broadcast %cst_12 : f32 to vector<8x128xf32>
    %37 = arith.maximumf %35, %36 : vector<8x128xf32>
    %c0_13 = arith.constant 0 : index
    %c0_14 = arith.constant 0 : index
    %38 = vector.load %arg4[%c0_13, %c0_14] : memref<1x128xf32, #tpu.memory_space<vmem>>, vector<1x128xf32>
    %39 = vector.broadcast %38 : vector<1x128xf32> to vector<8x128xf32>
    %40 = arith.mulf %37, %39 : vector<8x128xf32>
    %cst_15 = arith.constant dense<0.000000e+00> : vector<8xf32>
    %41 = vector.multi_reduction <add>, %40, %cst_15 [1] : vector<8x128xf32> to vector<8xf32>
    %42 = vector.shape_cast %41 : vector<8xf32> to vector<8x1xf32>
    %43 = math.tanh %42 : vector<8x1xf32>
    %c5_i32_16 = arith.constant 5 : i32
    %44 = vector.broadcast %c5_i32_16 : i32 to vector<8x1xi32>
    %45 = arith.cmpi slt, %5, %44 : vector<8x1xi32>
    %cst_17 = arith.constant -2.000000e+00 : f32
    %46 = vector.broadcast %cst_17 : f32 to vector<8x1xf32>
    %47 = arith.select %45, %43, %46 : vector<8x1xi1>, vector<8x1xf32>
    %48 = vector.broadcast %47 : vector<8x1xf32> to vector<8x8xf32>
    %49 = arith.mulf %4, %48 : vector<8x8xf32>
    %cst_18 = arith.constant dense<0.000000e+00> : vector<8xf32>
    %50 = vector.multi_reduction <add>, %49, %cst_18 [0] : vector<8x8xf32> to vector<8xf32>
    %51 = vector.shape_cast %50 : vector<8xf32> to vector<1x8xf32>
    %52 = vector.broadcast %47 : vector<8x1xf32> to vector<8x8xf32>
    %53 = vector.broadcast %51 : vector<1x8xf32> to vector<8x8xf32>
    %54 = arith.cmpf ogt, %52, %53 : vector<8x8xf32>
    %55 = vector.broadcast %47 : vector<8x1xf32> to vector<8x8xf32>
    %56 = vector.broadcast %51 : vector<1x8xf32> to vector<8x8xf32>
    %57 = arith.cmpf oeq, %55, %56 : vector<8x8xf32>
    %58 = arith.cmpi slt, %0, %1 : vector<8x8xi32>
    %59 = arith.andi %57, %58 : vector<8x8xi1>
    %60 = arith.ori %54, %59 : vector<8x8xi1>
    %61 = arith.extui %60 : vector<8x8xi1> to vector<8x8xi32>
    %62 = arith.sitofp %61 : vector<8x8xi32> to vector<8x8xf32>
    %cst_19 = arith.constant dense<0.000000e+00> : vector<8xf32>
    %63 = vector.multi_reduction <add>, %62, %cst_19 [0] : vector<8x8xf32> to vector<8xf32>
    %64 = vector.shape_cast %63 : vector<8xf32> to vector<1x8xf32>
    %65 = vector.broadcast %64 : vector<1x8xf32> to vector<8x8xf32>
    %66 = arith.mulf %4, %65 : vector<8x8xf32>
    %cst_20 = arith.constant dense<0.000000e+00> : vector<8xf32>
    %67 = vector.multi_reduction <add>, %66, %cst_20 [1] : vector<8x8xf32> to vector<8xf32>
    %68 = vector.shape_cast %67 : vector<8xf32> to vector<8x1xf32>
    %69 = arith.sitofp %0 : vector<8x8xi32> to vector<8x8xf32>
    %70 = vector.broadcast %64 : vector<1x8xf32> to vector<8x8xf32>
    %71 = arith.cmpf oeq, %70, %69 : vector<8x8xf32>
    %c3_i32 = arith.constant 3 : i32
    %72 = vector.broadcast %c3_i32 : i32 to vector<8x8xi32>
    %73 = arith.cmpi slt, %0, %72 : vector<8x8xi32>
    %74 = arith.andi %71, %73 : vector<8x8xi1>
    %75 = arith.extui %74 : vector<8x8xi1> to vector<8x8xi32>
    %76 = arith.sitofp %75 : vector<8x8xi32> to vector<8x8xf32>
    %77 = arith.sitofp %1 : vector<8x8xi32> to vector<8x8xf32>
    %78 = vector.broadcast %68 : vector<8x1xf32> to vector<8x8xf32>
    %79 = arith.cmpf oeq, %78, %77 : vector<8x8xf32>
    %c3_i32_21 = arith.constant 3 : i32
    %80 = vector.broadcast %c3_i32_21 : i32 to vector<8x8xi32>
    %81 = arith.cmpi slt, %1, %80 : vector<8x8xi32>
    %82 = arith.andi %79, %81 : vector<8x8xi1>
    %83 = arith.extui %82 : vector<8x8xi1> to vector<8x8xi32>
    %84 = arith.sitofp %83 : vector<8x8xi32> to vector<8x8xf32>
    %85 = vector.broadcast %43 : vector<8x1xf32> to vector<8x128xf32>
    %86 = arith.mulf %37, %85 : vector<8x128xf32>
    %cst_22 = arith.constant dense<0.000000e+00> : vector<8x128xf32>
    %87 = tpu.matmul %76, %86, %cst_22 {dimension_numbers = #tpu.dot_dimension_numbers<[1], [0], [0], [1], [0, 0, 1, 1], [], []>} : vector<8x8xf32>, vector<8x128xf32>, vector<8x128xf32> -> vector<8x128xf32>
    %cst_23 = arith.constant dense<0.000000e+00> : vector<8x8xf32>
    %88 = tpu.matmul %6, %84, %cst_23 {dimension_numbers = #tpu.dot_dimension_numbers<[1], [0], [0], [1], [0, 0, 1, 1], [], []>} : vector<8x8xf32>, vector<8x8xf32>, vector<8x8xf32> -> vector<8x8xf32>
    %cst_24 = arith.constant dense<0.000000e+00> : vector<8x8xf32>
    %89 = tpu.matmul %76, %88, %cst_24 {dimension_numbers = #tpu.dot_dimension_numbers<[1], [0], [0], [1], [0, 0, 1, 1], [], []>} : vector<8x8xf32>, vector<8x8xf32>, vector<8x8xf32> -> vector<8x8xf32>
    %c0_25 = arith.constant 0 : index
    %c0_26 = arith.constant 0 : index
    %90 = vector.load %arg5[%c0_25, %c0_26] : memref<128x128xf32, #tpu.memory_space<vmem>>, vector<128x128xf32>
    %c0_27 = arith.constant 0 : index
    %c0_28 = arith.constant 0 : index
    %91 = vector.load %arg6[%c0_27, %c0_28] : memref<1x128xf32, #tpu.memory_space<vmem>>, vector<1x128xf32>
    %c3_i32_29 = arith.constant 3 : i32
    %92 = vector.broadcast %c3_i32_29 : i32 to vector<8x1xi32>
    %93 = arith.cmpi slt, %5, %92 : vector<8x1xi32>
    %94 = arith.extui %93 : vector<8x1xi1> to vector<8x1xi32>
    %95 = arith.sitofp %94 : vector<8x1xi32> to vector<8x1xf32>
    %96 = vector.broadcast %95 : vector<8x1xf32> to vector<8x8xf32>
    %97 = arith.mulf %4, %96 : vector<8x8xf32>
    %98 = arith.addf %89, %97 : vector<8x8xf32>
    %cst_30 = arith.constant dense<0.000000e+00> : vector<8xf32>
    %99 = vector.multi_reduction <add>, %98, %cst_30 [1] : vector<8x8xf32> to vector<8xf32>
    %100 = vector.shape_cast %99 : vector<8xf32> to vector<8x1xf32>
    %cst_31 = arith.constant 0.000000e+00 : f32
    %101 = vector.broadcast %cst_31 : f32 to vector<8x1xf32>
    %102 = arith.cmpf ogt, %100, %101 : vector<8x1xf32>
    %103 = math.rsqrt %100 : vector<8x1xf32>
    %cst_32 = arith.constant 0.000000e+00 : f32
    %104 = vector.broadcast %cst_32 : f32 to vector<8x1xf32>
    %105 = arith.select %102, %103, %104 : vector<8x1xi1>, vector<8x1xf32>
    %106 = vector.broadcast %105 : vector<8x1xf32> to vector<8x8xf32>
    %107 = arith.mulf %4, %106 : vector<8x8xf32>
    %cst_33 = arith.constant dense<0.000000e+00> : vector<8xf32>
    %108 = vector.multi_reduction <add>, %107, %cst_33 [0] : vector<8x8xf32> to vector<8xf32>
    %109 = vector.shape_cast %108 : vector<8xf32> to vector<1x8xf32>
    %110 = vector.broadcast %105 : vector<8x1xf32> to vector<8x8xf32>
    %111 = arith.mulf %110, %98 : vector<8x8xf32>
    %112 = vector.broadcast %109 : vector<1x8xf32> to vector<8x8xf32>
    %113 = arith.mulf %111, %112 : vector<8x8xf32>
    %cst_34 = arith.constant dense<0.000000e+00> : vector<8x128xf32>
    %114 = tpu.matmul %87, %90, %cst_34 {dimension_numbers = #tpu.dot_dimension_numbers<[1], [0], [0], [1], [0, 0, 1, 1], [], []>} : vector<8x128xf32>, vector<128x128xf32>, vector<8x128xf32> -> vector<8x128xf32>
    %cst_35 = arith.constant dense<0.000000e+00> : vector<8x128xf32>
    %115 = tpu.matmul %113, %114, %cst_35 {dimension_numbers = #tpu.dot_dimension_numbers<[1], [0], [0], [1], [0, 0, 1, 1], [], []>} : vector<8x8xf32>, vector<8x128xf32>, vector<8x128xf32> -> vector<8x128xf32>
    %116 = vector.broadcast %91 : vector<1x128xf32> to vector<8x128xf32>
    %117 = arith.addf %115, %116 : vector<8x128xf32>
    %cst_36 = arith.constant 0.000000e+00 : f32
    %118 = vector.broadcast %cst_36 : f32 to vector<8x128xf32>
    %119 = arith.maximumf %117, %118 : vector<8x128xf32>
    %c0_37 = arith.constant 0 : index
    %c0_38 = arith.constant 0 : index
    %120 = vector.load %arg7[%c0_37, %c0_38] : memref<1x128xf32, #tpu.memory_space<vmem>>, vector<1x128xf32>
    %121 = vector.broadcast %120 : vector<1x128xf32> to vector<8x128xf32>
    %122 = arith.mulf %119, %121 : vector<8x128xf32>
    %cst_39 = arith.constant dense<0.000000e+00> : vector<8xf32>
    %123 = vector.multi_reduction <add>, %122, %cst_39 [1] : vector<8x128xf32> to vector<8xf32>
    %124 = vector.shape_cast %123 : vector<8xf32> to vector<8x1xf32>
    %125 = math.tanh %124 : vector<8x1xf32>
    %c3_i32_40 = arith.constant 3 : i32
    %126 = vector.broadcast %c3_i32_40 : i32 to vector<8x1xi32>
    %127 = arith.cmpi slt, %5, %126 : vector<8x1xi32>
    %cst_41 = arith.constant -2.000000e+00 : f32
    %128 = vector.broadcast %cst_41 : f32 to vector<8x1xf32>
    %129 = arith.select %127, %125, %128 : vector<8x1xi1>, vector<8x1xf32>
    %130 = vector.broadcast %129 : vector<8x1xf32> to vector<8x8xf32>
    %131 = arith.mulf %4, %130 : vector<8x8xf32>
    %cst_42 = arith.constant dense<0.000000e+00> : vector<8xf32>
    %132 = vector.multi_reduction <add>, %131, %cst_42 [0] : vector<8x8xf32> to vector<8xf32>
    %133 = vector.shape_cast %132 : vector<8xf32> to vector<1x8xf32>
    %134 = vector.broadcast %129 : vector<8x1xf32> to vector<8x8xf32>
    %135 = vector.broadcast %133 : vector<1x8xf32> to vector<8x8xf32>
    %136 = arith.cmpf ogt, %134, %135 : vector<8x8xf32>
    %137 = vector.broadcast %129 : vector<8x1xf32> to vector<8x8xf32>
    %138 = vector.broadcast %133 : vector<1x8xf32> to vector<8x8xf32>
    %139 = arith.cmpf oeq, %137, %138 : vector<8x8xf32>
    %140 = arith.cmpi slt, %0, %1 : vector<8x8xi32>
    %141 = arith.andi %139, %140 : vector<8x8xi1>
    %142 = arith.ori %136, %141 : vector<8x8xi1>
    %143 = arith.extui %142 : vector<8x8xi1> to vector<8x8xi32>
    %144 = arith.sitofp %143 : vector<8x8xi32> to vector<8x8xf32>
    %cst_43 = arith.constant dense<0.000000e+00> : vector<8xf32>
    %145 = vector.multi_reduction <add>, %144, %cst_43 [0] : vector<8x8xf32> to vector<8xf32>
    %146 = vector.shape_cast %145 : vector<8xf32> to vector<1x8xf32>
    %147 = vector.broadcast %146 : vector<1x8xf32> to vector<8x8xf32>
    %148 = arith.mulf %4, %147 : vector<8x8xf32>
    %cst_44 = arith.constant dense<0.000000e+00> : vector<8xf32>
    %149 = vector.multi_reduction <add>, %148, %cst_44 [1] : vector<8x8xf32> to vector<8xf32>
    %150 = vector.shape_cast %149 : vector<8xf32> to vector<8x1xf32>
    %151 = arith.sitofp %0 : vector<8x8xi32> to vector<8x8xf32>
    %152 = vector.broadcast %146 : vector<1x8xf32> to vector<8x8xf32>
    %153 = arith.cmpf oeq, %152, %151 : vector<8x8xf32>
    %c2_i32 = arith.constant 2 : i32
    %154 = vector.broadcast %c2_i32 : i32 to vector<8x8xi32>
    %155 = arith.cmpi slt, %0, %154 : vector<8x8xi32>
    %156 = arith.andi %153, %155 : vector<8x8xi1>
    %157 = arith.extui %156 : vector<8x8xi1> to vector<8x8xi32>
    %158 = arith.sitofp %157 : vector<8x8xi32> to vector<8x8xf32>
    %159 = arith.sitofp %1 : vector<8x8xi32> to vector<8x8xf32>
    %160 = vector.broadcast %150 : vector<8x1xf32> to vector<8x8xf32>
    %161 = arith.cmpf oeq, %160, %159 : vector<8x8xf32>
    %c2_i32_45 = arith.constant 2 : i32
    %162 = vector.broadcast %c2_i32_45 : i32 to vector<8x8xi32>
    %163 = arith.cmpi slt, %1, %162 : vector<8x8xi32>
    %164 = arith.andi %161, %163 : vector<8x8xi1>
    %165 = arith.extui %164 : vector<8x8xi1> to vector<8x8xi32>
    %166 = arith.sitofp %165 : vector<8x8xi32> to vector<8x8xf32>
    %167 = vector.broadcast %125 : vector<8x1xf32> to vector<8x128xf32>
    %168 = arith.mulf %119, %167 : vector<8x128xf32>
    %cst_46 = arith.constant dense<0.000000e+00> : vector<8x128xf32>
    %169 = tpu.matmul %158, %168, %cst_46 {dimension_numbers = #tpu.dot_dimension_numbers<[1], [0], [0], [1], [0, 0, 1, 1], [], []>} : vector<8x8xf32>, vector<8x128xf32>, vector<8x128xf32> -> vector<8x128xf32>
    %cst_47 = arith.constant dense<0.000000e+00> : vector<8x8xf32>
    %170 = tpu.matmul %89, %166, %cst_47 {dimension_numbers = #tpu.dot_dimension_numbers<[1], [0], [0], [1], [0, 0, 1, 1], [], []>} : vector<8x8xf32>, vector<8x8xf32>, vector<8x8xf32> -> vector<8x8xf32>
    %cst_48 = arith.constant dense<0.000000e+00> : vector<8x8xf32>
    %171 = tpu.matmul %158, %170, %cst_48 {dimension_numbers = #tpu.dot_dimension_numbers<[1], [0], [0], [1], [0, 0, 1, 1], [], []>} : vector<8x8xf32>, vector<8x8xf32>, vector<8x8xf32> -> vector<8x8xf32>
    %c0_49 = arith.constant 0 : index
    %c0_50 = arith.constant 0 : index
    %172 = vector.load %arg8[%c0_49, %c0_50] : memref<128x128xf32, #tpu.memory_space<vmem>>, vector<128x128xf32>
    %c0_51 = arith.constant 0 : index
    %c0_52 = arith.constant 0 : index
    %173 = vector.load %arg9[%c0_51, %c0_52] : memref<1x128xf32, #tpu.memory_space<vmem>>, vector<1x128xf32>
    %c2_i32_53 = arith.constant 2 : i32
    %174 = vector.broadcast %c2_i32_53 : i32 to vector<8x1xi32>
    %175 = arith.cmpi slt, %5, %174 : vector<8x1xi32>
    %176 = arith.extui %175 : vector<8x1xi1> to vector<8x1xi32>
    %177 = arith.sitofp %176 : vector<8x1xi32> to vector<8x1xf32>
    %178 = vector.broadcast %177 : vector<8x1xf32> to vector<8x8xf32>
    %179 = arith.mulf %4, %178 : vector<8x8xf32>
    %180 = arith.addf %171, %179 : vector<8x8xf32>
    %cst_54 = arith.constant dense<0.000000e+00> : vector<8xf32>
    %181 = vector.multi_reduction <add>, %180, %cst_54 [1] : vector<8x8xf32> to vector<8xf32>
    %182 = vector.shape_cast %181 : vector<8xf32> to vector<8x1xf32>
    %cst_55 = arith.constant 0.000000e+00 : f32
    %183 = vector.broadcast %cst_55 : f32 to vector<8x1xf32>
    %184 = arith.cmpf ogt, %182, %183 : vector<8x1xf32>
    %185 = math.rsqrt %182 : vector<8x1xf32>
    %cst_56 = arith.constant 0.000000e+00 : f32
    %186 = vector.broadcast %cst_56 : f32 to vector<8x1xf32>
    %187 = arith.select %184, %185, %186 : vector<8x1xi1>, vector<8x1xf32>
    %188 = vector.broadcast %187 : vector<8x1xf32> to vector<8x8xf32>
    %189 = arith.mulf %4, %188 : vector<8x8xf32>
    %cst_57 = arith.constant dense<0.000000e+00> : vector<8xf32>
    %190 = vector.multi_reduction <add>, %189, %cst_57 [0] : vector<8x8xf32> to vector<8xf32>
    %191 = vector.shape_cast %190 : vector<8xf32> to vector<1x8xf32>
    %192 = vector.broadcast %187 : vector<8x1xf32> to vector<8x8xf32>
    %193 = arith.mulf %192, %180 : vector<8x8xf32>
    %194 = vector.broadcast %191 : vector<1x8xf32> to vector<8x8xf32>
    %195 = arith.mulf %193, %194 : vector<8x8xf32>
    %cst_58 = arith.constant dense<0.000000e+00> : vector<8x128xf32>
    %196 = tpu.matmul %169, %172, %cst_58 {dimension_numbers = #tpu.dot_dimension_numbers<[1], [0], [0], [1], [0, 0, 1, 1], [], []>} : vector<8x128xf32>, vector<128x128xf32>, vector<8x128xf32> -> vector<8x128xf32>
    %cst_59 = arith.constant dense<0.000000e+00> : vector<8x128xf32>
    %197 = tpu.matmul %195, %196, %cst_59 {dimension_numbers = #tpu.dot_dimension_numbers<[1], [0], [0], [1], [0, 0, 1, 1], [], []>} : vector<8x8xf32>, vector<8x128xf32>, vector<8x128xf32> -> vector<8x128xf32>
    %198 = vector.broadcast %173 : vector<1x128xf32> to vector<8x128xf32>
    %199 = arith.addf %197, %198 : vector<8x128xf32>
    %c0_60 = arith.constant 0 : index
    %c0_61 = arith.constant 0 : index
    %200 = vector.load %arg10[%c0_60, %c0_61] : memref<8x128xf32, #tpu.memory_space<vmem>>, vector<8x128xf32>
    tpu.vector_store %arg10[%c0_60, %c0_61], %199 {strides = array<i32>} : memref<8x128xf32, #tpu.memory_space<vmem>>, vector<8x128xf32>,
    return
  }
}

</mosaic_0001>

<llo_original>
// kernel: advanced_gcn_forward.1
$region0: #{advanced_gcn_forward.1}
  #allocation0 [shape = 'u32[]', space=smem, size = 0x4, offset = 0x4, fixed_abs, tag = 'smem constant byte address 0x4 - core index']
  #allocation1 [shape = 'u32[144,128]{1,0:T(1,128)}', space=vmem, size = 0x12000, scoped, tag = 'internal scratch']
  %s0 = inlined_call_operand.vmem [shape: f32[8,128], index: 0, kind: input, shape index: {}]
  %s1 = inlined_call_operand.vmem [shape: f32[8,8], index: 1, kind: input, shape index: {}]
  %s2 = inlined_call_operand.vmem [shape: f32[128,128], index: 2, kind: input, shape index: {}]
  %s3 = inlined_call_operand.vmem [shape: f32[1,128], index: 3, kind: input, shape index: {}]
  %s4 = inlined_call_operand.vmem [shape: f32[1,128], index: 4, kind: input, shape index: {}]
  %s5 = inlined_call_operand.vmem [shape: f32[128,128], index: 5, kind: input, shape index: {}]
  %s6 = inlined_call_operand.vmem [shape: f32[1,128], index: 6, kind: input, shape index: {}]
  %s7 = inlined_call_operand.vmem [shape: f32[1,128], index: 7, kind: input, shape index: {}]
  %s8 = inlined_call_operand.vmem [shape: f32[128,128], index: 8, kind: input, shape index: {}]
  %s9 = inlined_call_operand.vmem [shape: f32[1,128], index: 9, kind: input, shape index: {}]
  %s10 = inlined_call_operand.vmem [shape: f32[8,128], index: 10, kind: output, shape index: {}]
  %s11 = sld [smem:[#allocation0]]
  $region50: #{advanced_gcn_forward.1} parent=0
    _
  %s13 = ssub.s32 1, %s11
  %s14 = scalar_select 0, %s13, %s11
  // Predicated region
  $region2: #{advanced_gcn_forward.1} parent=0 // pred_check
    _
  $region3: #{advanced_gcn_forward.1} parent=0 // pred_check_branch
    %16 = sbr.rel (0) target = $region5
  $region4: #{advanced_gcn_forward.1} parent=0 // pred_region
    _
  $region5: #{advanced_gcn_forward.1} parent=0 // pred_fallthru
    _
  // Predicated region
  $region6: #{advanced_gcn_forward.1} parent=0 // pred_check
    _
  $region7: #{advanced_gcn_forward.1} parent=0 // pred_check_branch
    %18 = sbr.rel (0) target = $region9
  $region8: #{advanced_gcn_forward.1} parent=0 // pred_region
    _
  $region9: #{advanced_gcn_forward.1} parent=0 // pred_fallthru
    _
  // Predicated region
  $region10: #{advanced_gcn_forward.1} parent=0 // pred_check
    _
  $region11: #{advanced_gcn_forward.1} parent=0 // pred_check_branch
    %20 = sbr.rel (0) target = $region13
  $region12: #{advanced_gcn_forward.1} parent=0 // pred_region
    _
  $region13: #{advanced_gcn_forward.1} parent=0 // pred_fallthru
    _
  // Predicated region
  $region14: #{advanced_gcn_forward.1} parent=0 // pred_check
    _
  $region15: #{advanced_gcn_forward.1} parent=0 // pred_check_branch
    %22 = sbr.rel (0) target = $region17
  $region16: #{advanced_gcn_forward.1} parent=0 // pred_region
    _
  $region17: #{advanced_gcn_forward.1} parent=0 // pred_fallthru
    _
  // Predicated region
  $region18: #{advanced_gcn_forward.1} parent=0 // pred_check
    _
  $region19: #{advanced_gcn_forward.1} parent=0 // pred_check_branch
    %24 = sbr.rel (0) target = $region21
  $region20: #{advanced_gcn_forward.1} parent=0 // pred_region
    _
  $region21: #{advanced_gcn_forward.1} parent=0 // pred_fallthru
    _
  // Predicated region
  $region22: #{advanced_gcn_forward.1} parent=0 // pred_check
    _
  $region23: #{advanced_gcn_forward.1} parent=0 // pred_check_branch
    %26 = sbr.rel (0) target = $region25
  $region24: #{advanced_gcn_forward.1} parent=0 // pred_region
    _
  $region25: #{advanced_gcn_forward.1} parent=0 // pred_fallthru
    _
  // Predicated region
  $region26: #{advanced_gcn_forward.1} parent=0 // pred_check
    _
  $region27: #{advanced_gcn_forward.1} parent=0 // pred_check_branch
    %28 = sbr.rel (0) target = $region29
  $region28: #{advanced_gcn_forward.1} parent=0 // pred_region
    _
  $region29: #{advanced_gcn_forward.1} parent=0 // pred_fallthru
    _
  // Predicated region
  $region30: #{advanced_gcn_forward.1} parent=0 // pred_check
    _
  $region31: #{advanced_gcn_forward.1} parent=0 // pred_check_branch
    %30 = sbr.rel (0) target = $region33
  $region32: #{advanced_gcn_forward.1} parent=0 // pred_region
    _
  $region33: #{advanced_gcn_forward.1} parent=0 // pred_fallthru
    _
  // Predicated region
  $region34: #{advanced_gcn_forward.1} parent=0 // pred_check
    _
  $region35: #{advanced_gcn_forward.1} parent=0 // pred_check_branch
    %32 = sbr.rel (0) target = $region37
  $region36: #{advanced_gcn_forward.1} parent=0 // pred_region
    _
  $region37: #{advanced_gcn_forward.1} parent=0 // pred_fallthru
    _
  // Predicated region
  $region38: #{advanced_gcn_forward.1} parent=0 // pred_check
    _
  $region39: #{advanced_gcn_forward.1} parent=0 // pred_check_branch
    %34 = sbr.rel (0) target = $region41
  $region40: #{advanced_gcn_forward.1} parent=0 // pred_region
    _
  $region41: #{advanced_gcn_forward.1} parent=0 // pred_fallthru
    _
  %v35 = vlaneseq
  %v36 = vshrl.u32 %v35, 7
  %v37 = vlaneseq
  %v38 = vand.u32 %v37, 127
  %vm39 = vcmp.eq.s32.totalorder %v36, %v38
  %v40 = vsel %vm39, 1, 0
  %v41 = vcvt.s32.f32 %v40
  %v42 = vld [vmem:[%s1] sm:$0xff]
  %v43 = vld [vmem:[%s0] sm:$0xff]
  %v44 = vld [vmem:[%s2] sm:$0xff]
  %v45 = vld [vmem:[%s2 + $0x8] sm:$0xff]
  %v46 = vld [vmem:[%s2 + $0x10] sm:$0xff]
  %v47 = vld [vmem:[%s2 + $0x18] sm:$0xff]
  %v48 = vld [vmem:[%s2 + $0x20] sm:$0xff]
  %v49 = vld [vmem:[%s2 + $0x28] sm:$0xff]
  %v50 = vld [vmem:[%s2 + $0x30] sm:$0xff]
  %v51 = vld [vmem:[%s2 + $0x38] sm:$0xff]
  %v52 = vld [vmem:[%s2 + $0x40] sm:$0xff]
  %v53 = vld [vmem:[%s2 + $0x48] sm:$0xff]
  %v54 = vld [vmem:[%s2 + $0x50] sm:$0xff]
  %v55 = vld [vmem:[%s2 + $0x58] sm:$0xff]
  %v56 = vld [vmem:[%s2 + $0x60] sm:$0xff]
  %v57 = vld [vmem:[%s2 + $0x68] sm:$0xff]
  %v58 = vld [vmem:[%s2 + $0x70] sm:$0xff]
  %v59 = vld [vmem:[%s2 + $0x78] sm:$0xff]
  %v60 = vld [vmem:[%s3] sm:$0x1]
  %vm61 = vcmp.lt.s32.totalorder %v36, 5
  %v62 = vsel %vm61, 1, 0
  %v63 = vcvt.s32.f32 %v62
  %v64 = vmul.f32 %v41, %v63
  %v65 = vadd.f32 %v42, %v64
  %vm66 = vcmask 64512
  %v67 = vsel %vm66, %v65, 0.0
  %68 = vadd.xlane.f32.xlu0 %v67
  %v69 = vpop.xlane.xlu0 %68
  %vm70 = vcmp.gt.f32.partialorder %v69, 0.0
  %v71 = vrsqrt.pop %v69
  %v72 = vsel %vm70, %v71, 0.0
  %v73 = vmul.f32 %v41, %v72
  %v74 = vsel %vm66, %v73, 0.0
  %v75 = vrot.slane %v74, 4
  %v76 = vadd.f32 %v74, %v75
  %v77 = vrot.slane %v76, 2
  %v78 = vadd.f32 %v76, %v77
  %v79 = vrot.slane %v78, 1
  %v80 = vadd.f32 %v78, %v79
  %v81 = vmul.f32 %v72, %v65
  %v82 = vmul.f32 %v81, %v80
  %83 = vmatprep.subr.mxu0 0.0
  %84 = vmatpush1.msra.mxu0 %v59
  %85 = vmatprep.subr.mxu0 0.0
  %86 = vmatpush1.msra.mxu0 %v58
  %87 = vmatprep.subr.mxu0 0.0
  %88 = vmatpush1.msra.mxu0 %v57
  %89 = vmatprep.subr.mxu0 0.0
  %90 = vmatpush1.msra.mxu0 %v56
  %91 = vmatprep.subr.mxu0 0.0
  %92 = vmatpush1.msra.mxu0 %v55
  %93 = vmatprep.subr.mxu0 0.0
  %94 = vmatpush1.msra.mxu0 %v54
  %95 = vmatprep.subr.mxu0 0.0
  %96 = vmatpush1.msra.mxu0 %v53
  %97 = vmatprep.subr.mxu0 0.0
  %98 = vmatpush1.msra.mxu0 %v52
  %99 = vmatprep.subr.mxu0 0.0
  %100 = vmatpush1.msra.mxu0 %v51
  %101 = vmatprep.subr.mxu0 0.0
  %102 = vmatpush1.msra.mxu0 %v50
  %103 = vmatprep.subr.mxu0 0.0
  %104 = vmatpush1.msra.mxu0 %v49
  %105 = vmatprep.subr.mxu0 0.0
  %106 = vmatpush1.msra.mxu0 %v48
  %107 = vmatprep.subr.mxu0 0.0
  %108 = vmatpush1.msra.mxu0 %v47
  %109 = vmatprep.subr.mxu0 0.0
  %110 = vmatpush1.msra.mxu0 %v46
  %111 = vmatprep.subr.mxu0 0.0
  %112 = vmatpush1.msra.mxu0 %v45
  %113 = vmatprep.subr.mxu0 0.0
  %114 = vmatpush1.msra.mxu0 %v44
  %115 = vmatprep.subr.mxu0 0.0
  %116 = vmatpush2.msra.mxu0 0.0
  %117 = vmatprep.subr.mxu0 0.0
  %118 = vmatpush2.msra.mxu0 0.0
  %119 = vmatprep.subr.mxu0 0.0
  %120 = vmatpush2.msra.mxu0 0.0
  %121 = vmatprep.subr.mxu0 0.0
  %122 = vmatpush2.msra.mxu0 0.0
  %123 = vmatprep.subr.mxu0 0.0
  %124 = vmatpush2.msra.mxu0 0.0
  %125 = vmatprep.subr.mxu0 0.0
  %126 = vmatpush2.msra.mxu0 0.0
  %127 = vmatprep.subr.mxu0 0.0
  %128 = vmatpush2.msra.mxu0 0.0
  %129 = vmatprep.subr.mxu0 0.0
  %130 = vmatpush2.msra.mxu0 0.0
  %131 = vmatprep.subr.mxu0 0.0
  %132 = vmatpush2.msra.mxu0 0.0
  %133 = vmatprep.subr.mxu0 0.0
  %134 = vmatpush2.msra.mxu0 0.0
  %135 = vmatprep.subr.mxu0 0.0
  %136 = vmatpush2.msra.mxu0 0.0
  %137 = vmatprep.subr.mxu0 0.0
  %138 = vmatpush2.msra.mxu0 0.0
  %139 = vmatprep.subr.mxu0 0.0
  %140 = vmatpush2.msra.mxu0 0.0
  %141 = vmatprep.subr.mxu0 0.0
  %142 = vmatpush2.msra.mxu0 0.0
  %143 = vmatprep.subr.mxu0 0.0
  %144 = vmatpush2.msra.mxu0 0.0
  %145 = vmatprep.subr.mxu0 0.0
  %146 = vmatpush2.msra.mxu0 0.0
  %147 = vmatprep.mubr.f32.mxu0 0.0
  %148 = vmatmul.mubr.f32.gmra.mxu0 %v43
  %v149 = vpop.f32.mrf.mxu0
  %v150 = vadd.f32 0.0, %v149
  %v151 = vpop.f32.mrf.mxu0
  %152 = vdwg.mxu0
  %v154 = vlaneseq
  %v155 = vshrl.u32 %v154, 7
  %v156 = vsub.s32 0, %v155
  %v157 = vrot.slane %v60, %v156
  %v160 = vsel %vm66, %v82, 0
  %162 = vmatprep.subr.mxu0 0.0
  %163 = vmatpush1.msra.mxu0 0.0
  %164 = vmatprep.subr.mxu0 0.0
  %165 = vmatpush1.msra.mxu0 0.0
  %166 = vmatprep.subr.mxu0 0.0
  %167 = vmatpush1.msra.mxu0 0.0
  %168 = vmatprep.subr.mxu0 0.0
  %169 = vmatpush1.msra.mxu0 0.0
  %170 = vmatprep.subr.mxu0 0.0
  %171 = vmatpush1.msra.mxu0 0.0
  %172 = vmatprep.subr.mxu0 0.0
  %173 = vmatpush1.msra.mxu0 0.0
  %174 = vmatprep.subr.mxu0 0.0
  %175 = vmatpush1.msra.mxu0 0.0
  %176 = vmatprep.subr.mxu0 0.0
  %177 = vmatpush1.msra.mxu0 0.0
  %178 = vmatprep.subr.mxu0 0.0
  %179 = vmatpush1.msra.mxu0 0.0
  %180 = vmatprep.subr.mxu0 0.0
  %181 = vmatpush1.msra.mxu0 0.0
  %182 = vmatprep.subr.mxu0 0.0
  %183 = vmatpush1.msra.mxu0 0.0
  %184 = vmatprep.subr.mxu0 0.0
  %185 = vmatpush1.msra.mxu0 0.0
  %186 = vmatprep.subr.mxu0 0.0
  %187 = vmatpush1.msra.mxu0 0.0
  %188 = vmatprep.subr.mxu0 0.0
  %189 = vmatpush1.msra.mxu0 0.0
  %190 = vmatprep.subr.mxu0 0.0
  %191 = vmatpush1.msra.mxu0 0.0
  %192 = vmatprep.subr.mxu0 0.0
  %193 = vmatpush1.msra.mxu0 %v150
  %194 = vmatprep.subr.mxu0 0.0
  %195 = vmatpush2.msra.mxu0 0.0
  %196 = vmatprep.subr.mxu0 0.0
  %197 = vmatpush2.msra.mxu0 0.0
  %198 = vmatprep.subr.mxu0 0.0
  %199 = vmatpush2.msra.mxu0 0.0
  %200 = vmatprep.subr.mxu0 0.0
  %201 = vmatpush2.msra.mxu0 0.0
  %202 = vmatprep.subr.mxu0 0.0
  %203 = vmatpush2.msra.mxu0 0.0
  %204 = vmatprep.subr.mxu0 0.0
  %205 = vmatpush2.msra.mxu0 0.0
  %206 = vmatprep.subr.mxu0 0.0
  %207 = vmatpush2.msra.mxu0 0.0
  %208 = vmatprep.subr.mxu0 0.0
  %209 = vmatpush2.msra.mxu0 0.0
  %210 = vmatprep.subr.mxu0 0.0
  %211 = vmatpush2.msra.mxu0 0.0
  %212 = vmatprep.subr.mxu0 0.0
  %213 = vmatpush2.msra.mxu0 0.0
  %214 = vmatprep.subr.mxu0 0.0
  %215 = vmatpush2.msra.mxu0 0.0
  %216 = vmatprep.subr.mxu0 0.0
  %217 = vmatpush2.msra.mxu0 0.0
  %218 = vmatprep.subr.mxu0 0.0
  %219 = vmatpush2.msra.mxu0 0.0
  %220 = vmatprep.subr.mxu0 0.0
  %221 = vmatpush2.msra.mxu0 0.0
  %222 = vmatprep.subr.mxu0 0.0
  %223 = vmatpush2.msra.mxu0 0.0
  %224 = vmatprep.subr.mxu0 0.0
  %225 = vmatpush2.msra.mxu0 0.0
  %226 = vmatprep.mubr.f32.mxu0 0.0
  %227 = vmatmul.mubr.f32.gmra.mxu0 %v160
  %v228 = vpop.f32.mrf.mxu0
  %v229 = vadd.f32 %v157, %v228
  %v230 = vpop.f32.mrf.mxu0
  %231 = vdwg.mxu0
  %v232 = vmax.f32 %v229, 0.0
  %v233 = vld [vmem:[%s4] sm:$0x1]
  %v235 = vlaneseq
  %v236 = vshrl.u32 %v235, 7
  %v237 = vsub.s32 0, %v236
  %v238 = vrot.slane %v233, %v237
  %v240 = vmul.f32 %v232, %v238
  %241 = vadd.xlane.f32.xlu0 %v240
  %v242 = vpop.xlane.xlu0 %241
  %v243 = vtanh.pop %v242
  %v244 = vsel %vm61, %v243, -2.0
  %v245 = vmul.f32 %v41, %v244
  %v246 = vsel %vm66, %v245, 0.0
  %v247 = vrot.slane %v246, 4
  %v248 = vadd.f32 %v246, %v247
  %v249 = vrot.slane %v248, 2
  %v250 = vadd.f32 %v248, %v249
  %v251 = vrot.slane %v250, 1
  %v252 = vadd.f32 %v250, %v251
  %vm253 = vcmp.gt.f32.partialorder %v244, %v252
  %vm254 = vcmp.eq.f32.partialorder %v244, %v252
  %vm255 = vcmp.lt.s32.totalorder %v36, %v38
  %vm256 = vmand %vm254, %vm255
  %vm257 = vmor %vm253, %vm256
  %v258 = vsel %vm257, 1, 0
  %v259 = vcvt.s32.f32 %v258
  %v260 = vsel %vm66, %v259, 0.0
  %v261 = vrot.slane %v260, 4
  %v262 = vadd.f32 %v260, %v261
  %v263 = vrot.slane %v262, 2
  %v264 = vadd.f32 %v262, %v263
  %v265 = vrot.slane %v264, 1
  %v266 = vadd.f32 %v264, %v265
  %v267 = vmul.f32 %v41, %v266
  %v268 = vsel %vm66, %v267, 0.0
  %269 = vadd.xlane.f32.xlu0 %v268
  %v270 = vpop.xlane.xlu0 %269
  %v271 = vcvt.s32.f32 %v36
  %vm272 = vcmp.eq.f32.partialorder %v266, %v271
  %vm273 = vcmp.lt.s32.totalorder %v36, 3
  %vm274 = vmand %vm272, %vm273
  %v275 = vsel %vm274, 1, 0
  %v276 = vcvt.s32.f32 %v275
  %v277 = vcvt.s32.f32 %v38
  %vm278 = vcmp.eq.f32.partialorder %v270, %v277
  %vm279 = vcmp.lt.s32.totalorder %v38, 3
  %vm280 = vmand %vm278, %vm279
  %v281 = vsel %vm280, 1, 0
  %v282 = vcvt.s32.f32 %v281
  %v283 = vmul.f32 %v232, %v243
  %v285 = vsel %vm66, %v276, 0
  %287 = vmatprep.subr.mxu0 0.0
  %288 = vmatpush1.msra.mxu0 0.0
  %289 = vmatprep.subr.mxu0 0.0
  %290 = vmatpush1.msra.mxu0 0.0
  %291 = vmatprep.subr.mxu0 0.0
  %292 = vmatpush1.msra.mxu0 0.0
  %293 = vmatprep.subr.mxu0 0.0
  %294 = vmatpush1.msra.mxu0 0.0
  %295 = vmatprep.subr.mxu0 0.0
  %296 = vmatpush1.msra.mxu0 0.0
  %297 = vmatprep.subr.mxu0 0.0
  %298 = vmatpush1.msra.mxu0 0.0
  %299 = vmatprep.subr.mxu0 0.0
  %300 = vmatpush1.msra.mxu0 0.0
  %301 = vmatprep.subr.mxu0 0.0
  %302 = vmatpush1.msra.mxu0 0.0
  %303 = vmatprep.subr.mxu0 0.0
  %304 = vmatpush1.msra.mxu0 0.0
  %305 = vmatprep.subr.mxu0 0.0
  %306 = vmatpush1.msra.mxu0 0.0
  %307 = vmatprep.subr.mxu0 0.0
  %308 = vmatpush1.msra.mxu0 0.0
  %309 = vmatprep.subr.mxu0 0.0
  %310 = vmatpush1.msra.mxu0 0.0
  %311 = vmatprep.subr.mxu0 0.0
  %312 = vmatpush1.msra.mxu0 0.0
  %313 = vmatprep.subr.mxu0 0.0
  %314 = vmatpush1.msra.mxu0 0.0
  %315 = vmatprep.subr.mxu0 0.0
  %316 = vmatpush1.msra.mxu0 0.0
  %317 = vmatprep.subr.mxu0 0.0
  %318 = vmatpush1.msra.mxu0 %v283
  %319 = vmatprep.subr.mxu0 0.0
  %320 = vmatpush2.msra.mxu0 0.0
  %321 = vmatprep.subr.mxu0 0.0
  %322 = vmatpush2.msra.mxu0 0.0
  %323 = vmatprep.subr.mxu0 0.0
  %324 = vmatpush2.msra.mxu0 0.0
  %325 = vmatprep.subr.mxu0 0.0
  %326 = vmatpush2.msra.mxu0 0.0
  %327 = vmatprep.subr.mxu0 0.0
  %328 = vmatpush2.msra.mxu0 0.0
  %329 = vmatprep.subr.mxu0 0.0
  %330 = vmatpush2.msra.mxu0 0.0
  %331 = vmatprep.subr.mxu0 0.0
  %332 = vmatpush2.msra.mxu0 0.0
  %333 = vmatprep.subr.mxu0 0.0
  %334 = vmatpush2.msra.mxu0 0.0
  %335 = vmatprep.subr.mxu0 0.0
  %336 = vmatpush2.msra.mxu0 0.0
  %337 = vmatprep.subr.mxu0 0.0
  %338 = vmatpush2.msra.mxu0 0.0
  %339 = vmatprep.subr.mxu0 0.0
  %340 = vmatpush2.msra.mxu0 0.0
  %341 = vmatprep.subr.mxu0 0.0
  %342 = vmatpush2.msra.mxu0 0.0
  %343 = vmatprep.subr.mxu0 0.0
  %344 = vmatpush2.msra.mxu0 0.0
  %345 = vmatprep.subr.mxu0 0.0
  %346 = vmatpush2.msra.mxu0 0.0
  %347 = vmatprep.subr.mxu0 0.0
  %348 = vmatpush2.msra.mxu0 0.0
  %349 = vmatprep.subr.mxu0 0.0
  %350 = vmatpush2.msra.mxu0 0.0
  %351 = vmatprep.mubr.f32.mxu0 0.0
  %352 = vmatmul.mubr.f32.gmra.mxu0 %v285
  %v353 = vpop.f32.mrf.mxu0
  %v354 = vadd.f32 0.0, %v353
  %v355 = vpop.f32.mrf.mxu0
  %356 = vdwg.mxu0
  %v358 = vsel %vm66, %v42, 0
  %360 = vmatprep.subr.mxu0 0.0
  %361 = vmatpush1.msra.mxu0 0.0
  %362 = vmatprep.subr.mxu0 0.0
  %363 = vmatpush1.msra.mxu0 0.0
  %364 = vmatprep.subr.mxu0 0.0
  %365 = vmatpush1.msra.mxu0 0.0
  %366 = vmatprep.subr.mxu0 0.0
  %367 = vmatpush1.msra.mxu0 0.0
  %368 = vmatprep.subr.mxu0 0.0
  %369 = vmatpush1.msra.mxu0 0.0
  %370 = vmatprep.subr.mxu0 0.0
  %371 = vmatpush1.msra.mxu0 0.0
  %372 = vmatprep.subr.mxu0 0.0
  %373 = vmatpush1.msra.mxu0 0.0
  %374 = vmatprep.subr.mxu0 0.0
  %375 = vmatpush1.msra.mxu0 0.0
  %376 = vmatprep.subr.mxu0 0.0
  %377 = vmatpush1.msra.mxu0 0.0
  %378 = vmatprep.subr.mxu0 0.0
  %379 = vmatpush1.msra.mxu0 0.0
  %380 = vmatprep.subr.mxu0 0.0
  %381 = vmatpush1.msra.mxu0 0.0
  %382 = vmatprep.subr.mxu0 0.0
  %383 = vmatpush1.msra.mxu0 0.0
  %384 = vmatprep.subr.mxu0 0.0
  %385 = vmatpush1.msra.mxu0 0.0
  %386 = vmatprep.subr.mxu0 0.0
  %387 = vmatpush1.msra.mxu0 0.0
  %388 = vmatprep.subr.mxu0 0.0
  %389 = vmatpush1.msra.mxu0 0.0
  %390 = vmatprep.subr.mxu0 0.0
  %391 = vmatpush1.msra.mxu0 %v282
  %392 = vmatprep.subr.mxu0 0.0
  %393 = vmatpush2.msra.mxu0 0.0
  %394 = vmatprep.subr.mxu0 0.0
  %395 = vmatpush2.msra.mxu0 0.0
  %396 = vmatprep.subr.mxu0 0.0
  %397 = vmatpush2.msra.mxu0 0.0
  %398 = vmatprep.subr.mxu0 0.0
  %399 = vmatpush2.msra.mxu0 0.0
  %400 = vmatprep.subr.mxu0 0.0
  %401 = vmatpush2.msra.mxu0 0.0
  %402 = vmatprep.subr.mxu0 0.0
  %403 = vmatpush2.msra.mxu0 0.0
  %404 = vmatprep.subr.mxu0 0.0
  %405 = vmatpush2.msra.mxu0 0.0
  %406 = vmatprep.subr.mxu0 0.0
  %407 = vmatpush2.msra.mxu0 0.0
  %408 = vmatprep.subr.mxu0 0.0
  %409 = vmatpush2.msra.mxu0 0.0
  %410 = vmatprep.subr.mxu0 0.0
  %411 = vmatpush2.msra.mxu0 0.0
  %412 = vmatprep.subr.mxu0 0.0
  %413 = vmatpush2.msra.mxu0 0.0
  %414 = vmatprep.subr.mxu0 0.0
  %415 = vmatpush2.msra.mxu0 0.0
  %416 = vmatprep.subr.mxu0 0.0
  %417 = vmatpush2.msra.mxu0 0.0
  %418 = vmatprep.subr.mxu0 0.0
  %419 = vmatpush2.msra.mxu0 0.0
  %420 = vmatprep.subr.mxu0 0.0
  %421 = vmatpush2.msra.mxu0 0.0
  %422 = vmatprep.subr.mxu0 0.0
  %423 = vmatpush2.msra.mxu0 0.0
  %424 = vmatprep.mubr.f32.mxu0 0.0
  %425 = vmatmul.mubr.f32.gmra.mxu0 %v358
  %v426 = vpop.f32.mrf.mxu0
  %v427 = vadd.f32 0.0, %v426
  %v428 = vpop.f32.mrf.mxu0
  %429 = vdwg.mxu0
  %430 = vmatprep.subr.mxu0 0.0
  %431 = vmatpush1.msra.mxu0 0.0
  %432 = vmatprep.subr.mxu0 0.0
  %433 = vmatpush1.msra.mxu0 0.0
  %434 = vmatprep.subr.mxu0 0.0
  %435 = vmatpush1.msra.mxu0 0.0
  %436 = vmatprep.subr.mxu0 0.0
  %437 = vmatpush1.msra.mxu0 0.0
  %438 = vmatprep.subr.mxu0 0.0
  %439 = vmatpush1.msra.mxu0 0.0
  %440 = vmatprep.subr.mxu0 0.0
  %441 = vmatpush1.msra.mxu0 0.0
  %442 = vmatprep.subr.mxu0 0.0
  %443 = vmatpush1.msra.mxu0 0.0
  %444 = vmatprep.subr.mxu0 0.0
  %445 = vmatpush1.msra.mxu0 0.0
  %446 = vmatprep.subr.mxu0 0.0
  %447 = vmatpush1.msra.mxu0 0.0
  %448 = vmatprep.subr.mxu0 0.0
  %449 = vmatpush1.msra.mxu0 0.0
  %450 = vmatprep.subr.mxu0 0.0
  %451 = vmatpush1.msra.mxu0 0.0
  %452 = vmatprep.subr.mxu0 0.0
  %453 = vmatpush1.msra.mxu0 0.0
  %454 = vmatprep.subr.mxu0 0.0
  %455 = vmatpush1.msra.mxu0 0.0
  %456 = vmatprep.subr.mxu0 0.0
  %457 = vmatpush1.msra.mxu0 0.0
  %458 = vmatprep.subr.mxu0 0.0
  %459 = vmatpush1.msra.mxu0 0.0
  %460 = vmatprep.subr.mxu0 0.0
  %461 = vmatpush1.msra.mxu0 %v427
  %462 = vmatprep.subr.mxu0 0.0
  %463 = vmatpush2.msra.mxu0 0.0
  %464 = vmatprep.subr.mxu0 0.0
  %465 = vmatpush2.msra.mxu0 0.0
  %466 = vmatprep.subr.mxu0 0.0
  %467 = vmatpush2.msra.mxu0 0.0
  %468 = vmatprep.subr.mxu0 0.0
  %469 = vmatpush2.msra.mxu0 0.0
  %470 = vmatprep.subr.mxu0 0.0
  %471 = vmatpush2.msra.mxu0 0.0
  %472 = vmatprep.subr.mxu0 0.0
  %473 = vmatpush2.msra.mxu0 0.0
  %474 = vmatprep.subr.mxu0 0.0
  %475 = vmatpush2.msra.mxu0 0.0
  %476 = vmatprep.subr.mxu0 0.0
  %477 = vmatpush2.msra.mxu0 0.0
  %478 = vmatprep.subr.mxu0 0.0
  %479 = vmatpush2.msra.mxu0 0.0
  %480 = vmatprep.subr.mxu0 0.0
  %481 = vmatpush2.msra.mxu0 0.0
  %482 = vmatprep.subr.mxu0 0.0
  %483 = vmatpush2.msra.mxu0 0.0
  %484 = vmatprep.subr.mxu0 0.0
  %485 = vmatpush2.msra.mxu0 0.0
  %486 = vmatprep.subr.mxu0 0.0
  %487 = vmatpush2.msra.mxu0 0.0
  %488 = vmatprep.subr.mxu0 0.0
  %489 = vmatpush2.msra.mxu0 0.0
  %490 = vmatprep.subr.mxu0 0.0
  %491 = vmatpush2.msra.mxu0 0.0
  %492 = vmatprep.subr.mxu0 0.0
  %493 = vmatpush2.msra.mxu0 0.0
  %494 = vmatprep.mubr.f32.mxu0 0.0
  %495 = vmatmul.mubr.f32.gmra.mxu0 %v285
  %v496 = vpop.f32.mrf.mxu0
  %v497 = vadd.f32 0.0, %v496
  %v498 = vpop.f32.mrf.mxu0
  %499 = vdwg.mxu0
  %v500 = vld [vmem:[%s5] sm:$0xff]
  %v501 = vld [vmem:[%s5 + $0x8] sm:$0xff]
  %v502 = vld [vmem:[%s5 + $0x10] sm:$0xff]
  %v503 = vld [vmem:[%s5 + $0x18] sm:$0xff]
  %v504 = vld [vmem:[%s5 + $0x20] sm:$0xff]
  %v505 = vld [vmem:[%s5 + $0x28] sm:$0xff]
  %v506 = vld [vmem:[%s5 + $0x30] sm:$0xff]
  %v507 = vld [vmem:[%s5 + $0x38] sm:$0xff]
  %v508 = vld [vmem:[%s5 + $0x40] sm:$0xff]
  %v509 = vld [vmem:[%s5 + $0x48] sm:$0xff]
  %v510 = vld [vmem:[%s5 + $0x50] sm:$0xff]
  %v511 = vld [vmem:[%s5 + $0x58] sm:$0xff]
  %v512 = vld [vmem:[%s5 + $0x60] sm:$0xff]
  %v513 = vld [vmem:[%s5 + $0x68] sm:$0xff]
  %v514 = vld [vmem:[%s5 + $0x70] sm:$0xff]
  %v515 = vld [vmem:[%s5 + $0x78] sm:$0xff]
  %v516 = vld [vmem:[%s6] sm:$0x1]
  %v517 = vsel %vm273, 1, 0
  %v518 = vcvt.s32.f32 %v517
  %v519 = vmul.f32 %v41, %v518
  %v520 = vadd.f32 %v497, %v519
  %v521 = vsel %vm66, %v520, 0.0
  %522 = vadd.xlane.f32.xlu0 %v521
  %v523 = vpop.xlane.xlu0 %522
  %vm524 = vcmp.gt.f32.partialorder %v523, 0.0
  %v525 = vrsqrt.pop %v523
  %v526 = vsel %vm524, %v525, 0.0
  %v527 = vmul.f32 %v41, %v526
  %v528 = vsel %vm66, %v527, 0.0
  %v529 = vrot.slane %v528, 4
  %v530 = vadd.f32 %v528, %v529
  %v531 = vrot.slane %v530, 2
  %v532 = vadd.f32 %v530, %v531
  %v533 = vrot.slane %v532, 1
  %v534 = vadd.f32 %v532, %v533
  %v535 = vmul.f32 %v526, %v520
  %v536 = vmul.f32 %v535, %v534
  %537 = vmatprep.subr.mxu0 0.0
  %538 = vmatpush1.msra.mxu0 %v515
  %539 = vmatprep.subr.mxu0 0.0
  %540 = vmatpush1.msra.mxu0 %v514
  %541 = vmatprep.subr.mxu0 0.0
  %542 = vmatpush1.msra.mxu0 %v513
  %543 = vmatprep.subr.mxu0 0.0
  %544 = vmatpush1.msra.mxu0 %v512
  %545 = vmatprep.subr.mxu0 0.0
  %546 = vmatpush1.msra.mxu0 %v511
  %547 = vmatprep.subr.mxu0 0.0
  %548 = vmatpush1.msra.mxu0 %v510
  %549 = vmatprep.subr.mxu0 0.0
  %550 = vmatpush1.msra.mxu0 %v509
  %551 = vmatprep.subr.mxu0 0.0
  %552 = vmatpush1.msra.mxu0 %v508
  %553 = vmatprep.subr.mxu0 0.0
  %554 = vmatpush1.msra.mxu0 %v507
  %555 = vmatprep.subr.mxu0 0.0
  %556 = vmatpush1.msra.mxu0 %v506
  %557 = vmatprep.subr.mxu0 0.0
  %558 = vmatpush1.msra.mxu0 %v505
  %559 = vmatprep.subr.mxu0 0.0
  %560 = vmatpush1.msra.mxu0 %v504
  %561 = vmatprep.subr.mxu0 0.0
  %562 = vmatpush1.msra.mxu0 %v503
  %563 = vmatprep.subr.mxu0 0.0
  %564 = vmatpush1.msra.mxu0 %v502
  %565 = vmatprep.subr.mxu0 0.0
  %566 = vmatpush1.msra.mxu0 %v501
  %567 = vmatprep.subr.mxu0 0.0
  %568 = vmatpush1.msra.mxu0 %v500
  %569 = vmatprep.subr.mxu0 0.0
  %570 = vmatpush2.msra.mxu0 0.0
  %571 = vmatprep.subr.mxu0 0.0
  %572 = vmatpush2.msra.mxu0 0.0
  %573 = vmatprep.subr.mxu0 0.0
  %574 = vmatpush2.msra.mxu0 0.0
  %575 = vmatprep.subr.mxu0 0.0
  %576 = vmatpush2.msra.mxu0 0.0
  %577 = vmatprep.subr.mxu0 0.0
  %578 = vmatpush2.msra.mxu0 0.0
  %579 = vmatprep.subr.mxu0 0.0
  %580 = vmatpush2.msra.mxu0 0.0
  %581 = vmatprep.subr.mxu0 0.0
  %582 = vmatpush2.msra.mxu0 0.0
  %583 = vmatprep.subr.mxu0 0.0
  %584 = vmatpush2.msra.mxu0 0.0
  %585 = vmatprep.subr.mxu0 0.0
  %586 = vmatpush2.msra.mxu0 0.0
  %587 = vmatprep.subr.mxu0 0.0
  %588 = vmatpush2.msra.mxu0 0.0
  %589 = vmatprep.subr.mxu0 0.0
  %590 = vmatpush2.msra.mxu0 0.0
  %591 = vmatprep.subr.mxu0 0.0
  %592 = vmatpush2.msra.mxu0 0.0
  %593 = vmatprep.subr.mxu0 0.0
  %594 = vmatpush2.msra.mxu0 0.0
  %595 = vmatprep.subr.mxu0 0.0
  %596 = vmatpush2.msra.mxu0 0.0
  %597 = vmatprep.subr.mxu0 0.0
  %598 = vmatpush2.msra.mxu0 0.0
  %599 = vmatprep.subr.mxu0 0.0
  %600 = vmatpush2.msra.mxu0 0.0
  %601 = vmatprep.mubr.f32.mxu0 0.0
  %602 = vmatmul.mubr.f32.gmra.mxu0 %v354
  %v603 = vpop.f32.mrf.mxu0
  %v604 = vadd.f32 0.0, %v603
  %v605 = vpop.f32.mrf.mxu0
  %606 = vdwg.mxu0
  %v608 = vlaneseq
  %v609 = vshrl.u32 %v608, 7
  %v610 = vsub.s32 0, %v609
  %v611 = vrot.slane %v516, %v610
  %v614 = vsel %vm66, %v536, 0
  %616 = vmatprep.subr.mxu0 0.0
  %617 = vmatpush1.msra.mxu0 0.0
  %618 = vmatprep.subr.mxu0 0.0
  %619 = vmatpush1.msra.mxu0 0.0
  %620 = vmatprep.subr.mxu0 0.0
  %621 = vmatpush1.msra.mxu0 0.0
  %622 = vmatprep.subr.mxu0 0.0
  %623 = vmatpush1.msra.mxu0 0.0
  %624 = vmatprep.subr.mxu0 0.0
  %625 = vmatpush1.msra.mxu0 0.0
  %626 = vmatprep.subr.mxu0 0.0
  %627 = vmatpush1.msra.mxu0 0.0
  %628 = vmatprep.subr.mxu0 0.0
  %629 = vmatpush1.msra.mxu0 0.0
  %630 = vmatprep.subr.mxu0 0.0
  %631 = vmatpush1.msra.mxu0 0.0
  %632 = vmatprep.subr.mxu0 0.0
  %633 = vmatpush1.msra.mxu0 0.0
  %634 = vmatprep.subr.mxu0 0.0
  %635 = vmatpush1.msra.mxu0 0.0
  %636 = vmatprep.subr.mxu0 0.0
  %637 = vmatpush1.msra.mxu0 0.0
  %638 = vmatprep.subr.mxu0 0.0
  %639 = vmatpush1.msra.mxu0 0.0
  %640 = vmatprep.subr.mxu0 0.0
  %641 = vmatpush1.msra.mxu0 0.0
  %642 = vmatprep.subr.mxu0 0.0
  %643 = vmatpush1.msra.mxu0 0.0
  %644 = vmatprep.subr.mxu0 0.0
  %645 = vmatpush1.msra.mxu0 0.0
  %646 = vmatprep.subr.mxu0 0.0
  %647 = vmatpush1.msra.mxu0 %v604
  %648 = vmatprep.subr.mxu0 0.0
  %649 = vmatpush2.msra.mxu0 0.0
  %650 = vmatprep.subr.mxu0 0.0
  %651 = vmatpush2.msra.mxu0 0.0
  %652 = vmatprep.subr.mxu0 0.0
  %653 = vmatpush2.msra.mxu0 0.0
  %654 = vmatprep.subr.mxu0 0.0
  %655 = vmatpush2.msra.mxu0 0.0
  %656 = vmatprep.subr.mxu0 0.0
  %657 = vmatpush2.msra.mxu0 0.0
  %658 = vmatprep.subr.mxu0 0.0
  %659 = vmatpush2.msra.mxu0 0.0
  %660 = vmatprep.subr.mxu0 0.0
  %661 = vmatpush2.msra.mxu0 0.0
  %662 = vmatprep.subr.mxu0 0.0
  %663 = vmatpush2.msra.mxu0 0.0
  %664 = vmatprep.subr.mxu0 0.0
  %665 = vmatpush2.msra.mxu0 0.0
  %666 = vmatprep.subr.mxu0 0.0
  %667 = vmatpush2.msra.mxu0 0.0
  %668 = vmatprep.subr.mxu0 0.0
  %669 = vmatpush2.msra.mxu0 0.0
  %670 = vmatprep.subr.mxu0 0.0
  %671 = vmatpush2.msra.mxu0 0.0
  %672 = vmatprep.subr.mxu0 0.0
  %673 = vmatpush2.msra.mxu0 0.0
  %674 = vmatprep.subr.mxu0 0.0
  %675 = vmatpush2.msra.mxu0 0.0
  %676 = vmatprep.subr.mxu0 0.0
  %677 = vmatpush2.msra.mxu0 0.0
  %678 = vmatprep.subr.mxu0 0.0
  %679 = vmatpush2.msra.mxu0 0.0
  %680 = vmatprep.mubr.f32.mxu0 0.0
  %681 = vmatmul.mubr.f32.gmra.mxu0 %v614
  %v682 = vpop.f32.mrf.mxu0
  %v683 = vadd.f32 %v611, %v682
  %v684 = vpop.f32.mrf.mxu0
  %685 = vdwg.mxu0
  %v686 = vmax.f32 %v683, 0.0
  %v687 = vld [vmem:[%s7] sm:$0x1]
  %v689 = vlaneseq
  %v690 = vshrl.u32 %v689, 7
  %v691 = vsub.s32 0, %v690
  %v692 = vrot.slane %v687, %v691
  %v694 = vmul.f32 %v686, %v692
  %695 = vadd.xlane.f32.xlu0 %v694
  %v696 = vpop.xlane.xlu0 %695
  %v697 = vtanh.pop %v696
  %v698 = vsel %vm273, %v697, -2.0
  %v699 = vmul.f32 %v41, %v698
  %v700 = vsel %vm66, %v699, 0.0
  %v701 = vrot.slane %v700, 4
  %v702 = vadd.f32 %v700, %v701
  %v703 = vrot.slane %v702, 2
  %v704 = vadd.f32 %v702, %v703
  %v705 = vrot.slane %v704, 1
  %v706 = vadd.f32 %v704, %v705
  %vm707 = vcmp.gt.f32.partialorder %v698, %v706
  %vm708 = vcmp.eq.f32.partialorder %v698, %v706
  %vm709 = vmand %vm708, %vm255
  %vm710 = vmor %vm707, %vm709
  %v711 = vsel %vm710, 1, 0
  %v712 = vcvt.s32.f32 %v711
  %v713 = vsel %vm66, %v712, 0.0
  %v714 = vrot.slane %v713, 4
  %v715 = vadd.f32 %v713, %v714
  %v716 = vrot.slane %v715, 2
  %v717 = vadd.f32 %v715, %v716
  %v718 = vrot.slane %v717, 1
  %v719 = vadd.f32 %v717, %v718
  %v720 = vmul.f32 %v41, %v719
  %v721 = vsel %vm66, %v720, 0.0
  %722 = vadd.xlane.f32.xlu0 %v721
  %v723 = vpop.xlane.xlu0 %722
  %vm724 = vcmp.eq.f32.partialorder %v719, %v271
  %vm725 = vcmp.lt.s32.totalorder %v36, 2
  %vm726 = vmand %vm724, %vm725
  %v727 = vsel %vm726, 1, 0
  %v728 = vcvt.s32.f32 %v727
  %vm729 = vcmp.eq.f32.partialorder %v723, %v277
  %vm730 = vcmp.lt.s32.totalorder %v38, 2
  %vm731 = vmand %vm729, %vm730
  %v732 = vsel %vm731, 1, 0
  %v733 = vcvt.s32.f32 %v732
  %v734 = vmul.f32 %v686, %v697
  %v736 = vsel %vm66, %v728, 0
  %738 = vmatprep.subr.mxu0 0.0
  %739 = vmatpush1.msra.mxu0 0.0
  %740 = vmatprep.subr.mxu0 0.0
  %741 = vmatpush1.msra.mxu0 0.0
  %742 = vmatprep.subr.mxu0 0.0
  %743 = vmatpush1.msra.mxu0 0.0
  %744 = vmatprep.subr.mxu0 0.0
  %745 = vmatpush1.msra.mxu0 0.0
  %746 = vmatprep.subr.mxu0 0.0
  %747 = vmatpush1.msra.mxu0 0.0
  %748 = vmatprep.subr.mxu0 0.0
  %749 = vmatpush1.msra.mxu0 0.0
  %750 = vmatprep.subr.mxu0 0.0
  %751 = vmatpush1.msra.mxu0 0.0
  %752 = vmatprep.subr.mxu0 0.0
  %753 = vmatpush1.msra.mxu0 0.0
  %754 = vmatprep.subr.mxu0 0.0
  %755 = vmatpush1.msra.mxu0 0.0
  %756 = vmatprep.subr.mxu0 0.0
  %757 = vmatpush1.msra.mxu0 0.0
  %758 = vmatprep.subr.mxu0 0.0
  %759 = vmatpush1.msra.mxu0 0.0
  %760 = vmatprep.subr.mxu0 0.0
  %761 = vmatpush1.msra.mxu0 0.0
  %762 = vmatprep.subr.mxu0 0.0
  %763 = vmatpush1.msra.mxu0 0.0
  %764 = vmatprep.subr.mxu0 0.0
  %765 = vmatpush1.msra.mxu0 0.0
  %766 = vmatprep.subr.mxu0 0.0
  %767 = vmatpush1.msra.mxu0 0.0
  %768 = vmatprep.subr.mxu0 0.0
  %769 = vmatpush1.msra.mxu0 %v734
  %770 = vmatprep.subr.mxu0 0.0
  %771 = vmatpush2.msra.mxu0 0.0
  %772 = vmatprep.subr.mxu0 0.0
  %773 = vmatpush2.msra.mxu0 0.0
  %774 = vmatprep.subr.mxu0 0.0
  %775 = vmatpush2.msra.mxu0 0.0
  %776 = vmatprep.subr.mxu0 0.0
  %777 = vmatpush2.msra.mxu0 0.0
  %778 = vmatprep.subr.mxu0 0.0
  %779 = vmatpush2.msra.mxu0 0.0
  %780 = vmatprep.subr.mxu0 0.0
  %781 = vmatpush2.msra.mxu0 0.0
  %782 = vmatprep.subr.mxu0 0.0
  %783 = vmatpush2.msra.mxu0 0.0
  %784 = vmatprep.subr.mxu0 0.0
  %785 = vmatpush2.msra.mxu0 0.0
  %786 = vmatprep.subr.mxu0 0.0
  %787 = vmatpush2.msra.mxu0 0.0
  %788 = vmatprep.subr.mxu0 0.0
  %789 = vmatpush2.msra.mxu0 0.0
  %790 = vmatprep.subr.mxu0 0.0
  %791 = vmatpush2.msra.mxu0 0.0
  %792 = vmatprep.subr.mxu0 0.0
  %793 = vmatpush2.msra.mxu0 0.0
  %794 = vmatprep.subr.mxu0 0.0
  %795 = vmatpush2.msra.mxu0 0.0
  %796 = vmatprep.subr.mxu0 0.0
  %797 = vmatpush2.msra.mxu0 0.0
  %798 = vmatprep.subr.mxu0 0.0
  %799 = vmatpush2.msra.mxu0 0.0
  %800 = vmatprep.subr.mxu0 0.0
  %801 = vmatpush2.msra.mxu0 0.0
  %802 = vmatprep.mubr.f32.mxu0 0.0
  %803 = vmatmul.mubr.f32.gmra.mxu0 %v736
  %v804 = vpop.f32.mrf.mxu0
  %v805 = vadd.f32 0.0, %v804
  %v806 = vpop.f32.mrf.mxu0
  %807 = vdwg.mxu0
  %v809 = vsel %vm66, %v497, 0
  %811 = vmatprep.subr.mxu0 0.0
  %812 = vmatpush1.msra.mxu0 0.0
  %813 = vmatprep.subr.mxu0 0.0
  %814 = vmatpush1.msra.mxu0 0.0
  %815 = vmatprep.subr.mxu0 0.0
  %816 = vmatpush1.msra.mxu0 0.0
  %817 = vmatprep.subr.mxu0 0.0
  %818 = vmatpush1.msra.mxu0 0.0
  %819 = vmatprep.subr.mxu0 0.0
  %820 = vmatpush1.msra.mxu0 0.0
  %821 = vmatprep.subr.mxu0 0.0
  %822 = vmatpush1.msra.mxu0 0.0
  %823 = vmatprep.subr.mxu0 0.0
  %824 = vmatpush1.msra.mxu0 0.0
  %825 = vmatprep.subr.mxu0 0.0
  %826 = vmatpush1.msra.mxu0 0.0
  %827 = vmatprep.subr.mxu0 0.0
  %828 = vmatpush1.msra.mxu0 0.0
  %829 = vmatprep.subr.mxu0 0.0
  %830 = vmatpush1.msra.mxu0 0.0
  %831 = vmatprep.subr.mxu0 0.0
  %832 = vmatpush1.msra.mxu0 0.0
  %833 = vmatprep.subr.mxu0 0.0
  %834 = vmatpush1.msra.mxu0 0.0
  %835 = vmatprep.subr.mxu0 0.0
  %836 = vmatpush1.msra.mxu0 0.0
  %837 = vmatprep.subr.mxu0 0.0
  %838 = vmatpush1.msra.mxu0 0.0
  %839 = vmatprep.subr.mxu0 0.0
  %840 = vmatpush1.msra.mxu0 0.0
  %841 = vmatprep.subr.mxu0 0.0
  %842 = vmatpush1.msra.mxu0 %v733
  %843 = vmatprep.subr.mxu0 0.0
  %844 = vmatpush2.msra.mxu0 0.0
  %845 = vmatprep.subr.mxu0 0.0
  %846 = vmatpush2.msra.mxu0 0.0
  %847 = vmatprep.subr.mxu0 0.0
  %848 = vmatpush2.msra.mxu0 0.0
  %849 = vmatprep.subr.mxu0 0.0
  %850 = vmatpush2.msra.mxu0 0.0
  %851 = vmatprep.subr.mxu0 0.0
  %852 = vmatpush2.msra.mxu0 0.0
  %853 = vmatprep.subr.mxu0 0.0
  %854 = vmatpush2.msra.mxu0 0.0
  %855 = vmatprep.subr.mxu0 0.0
  %856 = vmatpush2.msra.mxu0 0.0
  %857 = vmatprep.subr.mxu0 0.0
  %858 = vmatpush2.msra.mxu0 0.0
  %859 = vmatprep.subr.mxu0 0.0
  %860 = vmatpush2.msra.mxu0 0.0
  %861 = vmatprep.subr.mxu0 0.0
  %862 = vmatpush2.msra.mxu0 0.0
  %863 = vmatprep.subr.mxu0 0.0
  %864 = vmatpush2.msra.mxu0 0.0
  %865 = vmatprep.subr.mxu0 0.0
  %866 = vmatpush2.msra.mxu0 0.0
  %867 = vmatprep.subr.mxu0 0.0
  %868 = vmatpush2.msra.mxu0 0.0
  %869 = vmatprep.subr.mxu0 0.0
  %870 = vmatpush2.msra.mxu0 0.0
  %871 = vmatprep.subr.mxu0 0.0
  %872 = vmatpush2.msra.mxu0 0.0
  %873 = vmatprep.subr.mxu0 0.0
  %874 = vmatpush2.msra.mxu0 0.0
  %875 = vmatprep.mubr.f32.mxu0 0.0
  %876 = vmatmul.mubr.f32.gmra.mxu0 %v809
  %v877 = vpop.f32.mrf.mxu0
  %v878 = vadd.f32 0.0, %v877
  %v879 = vpop.f32.mrf.mxu0
  %880 = vdwg.mxu0
  %v881 = vld [vmem:[%s8] sm:$0xff]
  %v882 = vld [vmem:[%s8 + $0x8] sm:$0xff]
  %v883 = vld [vmem:[%s8 + $0x10] sm:$0xff]
  %v884 = vld [vmem:[%s8 + $0x18] sm:$0xff]
  %v885 = vld [vmem:[%s8 + $0x20] sm:$0xff]
  %v886 = vld [vmem:[%s8 + $0x28] sm:$0xff]
  %v887 = vld [vmem:[%s8 + $0x30] sm:$0xff]
  %v888 = vld [vmem:[%s8 + $0x38] sm:$0xff]
  %v889 = vld [vmem:[%s8 + $0x40] sm:$0xff]
  %v890 = vld [vmem:[%s8 + $0x48] sm:$0xff]
  %v891 = vld [vmem:[%s8 + $0x50] sm:$0xff]
  %v892 = vld [vmem:[%s8 + $0x58] sm:$0xff]
  %v893 = vld [vmem:[%s8 + $0x60] sm:$0xff]
  %v894 = vld [vmem:[%s8 + $0x68] sm:$0xff]
  %v895 = vld [vmem:[%s8 + $0x70] sm:$0xff]
  %v896 = vld [vmem:[%s8 + $0x78] sm:$0xff]
  %v897 = vld [vmem:[%s9] sm:$0x1]
  %v898 = vsel %vm725, 1, 0
  %v899 = vcvt.s32.f32 %v898
  %v900 = vmul.f32 %v41, %v899
  %901 = vmatprep.subr.mxu0 0.0
  %902 = vmatpush1.msra.mxu0 0.0
  %903 = vmatprep.subr.mxu0 0.0
  %904 = vmatpush1.msra.mxu0 0.0
  %905 = vmatprep.subr.mxu0 0.0
  %906 = vmatpush1.msra.mxu0 0.0
  %907 = vmatprep.subr.mxu0 0.0
  %908 = vmatpush1.msra.mxu0 0.0
  %909 = vmatprep.subr.mxu0 0.0
  %910 = vmatpush1.msra.mxu0 0.0
  %911 = vmatprep.subr.mxu0 0.0
  %912 = vmatpush1.msra.mxu0 0.0
  %913 = vmatprep.subr.mxu0 0.0
  %914 = vmatpush1.msra.mxu0 0.0
  %915 = vmatprep.subr.mxu0 0.0
  %916 = vmatpush1.msra.mxu0 0.0
  %917 = vmatprep.subr.mxu0 0.0
  %918 = vmatpush1.msra.mxu0 0.0
  %919 = vmatprep.subr.mxu0 0.0
  %920 = vmatpush1.msra.mxu0 0.0
  %921 = vmatprep.subr.mxu0 0.0
  %922 = vmatpush1.msra.mxu0 0.0
  %923 = vmatprep.subr.mxu0 0.0
  %924 = vmatpush1.msra.mxu0 0.0
  %925 = vmatprep.subr.mxu0 0.0
  %926 = vmatpush1.msra.mxu0 0.0
  %927 = vmatprep.subr.mxu0 0.0
  %928 = vmatpush1.msra.mxu0 0.0
  %929 = vmatprep.subr.mxu0 0.0
  %930 = vmatpush1.msra.mxu0 0.0
  %931 = vmatprep.subr.mxu0 0.0
  %932 = vmatpush1.msra.mxu0 %v878
  %933 = vmatprep.subr.mxu0 0.0
  %934 = vmatpush2.msra.mxu0 0.0
  %935 = vmatprep.subr.mxu0 0.0
  %936 = vmatpush2.msra.mxu0 0.0
  %937 = vmatprep.subr.mxu0 0.0
  %938 = vmatpush2.msra.mxu0 0.0
  %939 = vmatprep.subr.mxu0 0.0
  %940 = vmatpush2.msra.mxu0 0.0
  %941 = vmatprep.subr.mxu0 0.0
  %942 = vmatpush2.msra.mxu0 0.0
  %943 = vmatprep.subr.mxu0 0.0
  %944 = vmatpush2.msra.mxu0 0.0
  %945 = vmatprep.subr.mxu0 0.0
  %946 = vmatpush2.msra.mxu0 0.0
  %947 = vmatprep.subr.mxu0 0.0
  %948 = vmatpush2.msra.mxu0 0.0
  %949 = vmatprep.subr.mxu0 0.0
  %950 = vmatpush2.msra.mxu0 0.0
  %951 = vmatprep.subr.mxu0 0.0
  %952 = vmatpush2.msra.mxu0 0.0
  %953 = vmatprep.subr.mxu0 0.0
  %954 = vmatpush2.msra.mxu0 0.0
  %955 = vmatprep.subr.mxu0 0.0
  %956 = vmatpush2.msra.mxu0 0.0
  %957 = vmatprep.subr.mxu0 0.0
  %958 = vmatpush2.msra.mxu0 0.0
  %959 = vmatprep.subr.mxu0 0.0
  %960 = vmatpush2.msra.mxu0 0.0
  %961 = vmatprep.subr.mxu0 0.0
  %962 = vmatpush2.msra.mxu0 0.0
  %963 = vmatprep.subr.mxu0 0.0
  %964 = vmatpush2.msra.mxu0 0.0
  %965 = vmatprep.mubr.f32.mxu0 0.0
  %966 = vmatmul.mubr.f32.gmra.mxu0 %v736
  %v967 = vpop.f32.mrf.mxu0
  %v968 = vadd.f32 %v900, %v967
  %v969 = vpop.f32.mrf.mxu0
  %970 = vdwg.mxu0
  %v971 = vsel %vm66, %v968, 0.0
  %972 = vadd.xlane.f32.xlu0 %v971
  %v973 = vpop.xlane.xlu0 %972
  %vm974 = vcmp.gt.f32.partialorder %v973, 0.0
  %v975 = vrsqrt.pop %v973
  %v976 = vsel %vm974, %v975, 0.0
  %v977 = vmul.f32 %v41, %v976
  %v978 = vsel %vm66, %v977, 0.0
  %v979 = vrot.slane %v978, 4
  %v980 = vadd.f32 %v978, %v979
  %v981 = vrot.slane %v980, 2
  %v982 = vadd.f32 %v980, %v981
  %v983 = vrot.slane %v982, 1
  %v984 = vadd.f32 %v982, %v983
  %v985 = vmul.f32 %v976, %v968
  %v986 = vmul.f32 %v985, %v984
  %987 = vmatprep.subr.mxu0 0.0
  %988 = vmatpush1.msra.mxu0 %v896
  %989 = vmatprep.subr.mxu0 0.0
  %990 = vmatpush1.msra.mxu0 %v895
  %991 = vmatprep.subr.mxu0 0.0
  %992 = vmatpush1.msra.mxu0 %v894
  %993 = vmatprep.subr.mxu0 0.0
  %994 = vmatpush1.msra.mxu0 %v893
  %995 = vmatprep.subr.mxu0 0.0
  %996 = vmatpush1.msra.mxu0 %v892
  %997 = vmatprep.subr.mxu0 0.0
  %998 = vmatpush1.msra.mxu0 %v891
  %999 = vmatprep.subr.mxu0 0.0
  %1000 = vmatpush1.msra.mxu0 %v890
  %1001 = vmatprep.subr.mxu0 0.0
  %1002 = vmatpush1.msra.mxu0 %v889
  %1003 = vmatprep.subr.mxu0 0.0
  %1004 = vmatpush1.msra.mxu0 %v888
  %1005 = vmatprep.subr.mxu0 0.0
  %1006 = vmatpush1.msra.mxu0 %v887
  %1007 = vmatprep.subr.mxu0 0.0
  %1008 = vmatpush1.msra.mxu0 %v886
  %1009 = vmatprep.subr.mxu0 0.0
  %1010 = vmatpush1.msra.mxu0 %v885
  %1011 = vmatprep.subr.mxu0 0.0
  %1012 = vmatpush1.msra.mxu0 %v884
  %1013 = vmatprep.subr.mxu0 0.0
  %1014 = vmatpush1.msra.mxu0 %v883
  %1015 = vmatprep.subr.mxu0 0.0
  %1016 = vmatpush1.msra.mxu0 %v882
  %1017 = vmatprep.subr.mxu0 0.0
  %1018 = vmatpush1.msra.mxu0 %v881
  %1019 = vmatprep.subr.mxu0 0.0
  %1020 = vmatpush2.msra.mxu0 0.0
  %1021 = vmatprep.subr.mxu0 0.0
  %1022 = vmatpush2.msra.mxu0 0.0
  %1023 = vmatprep.subr.mxu0 0.0
  %1024 = vmatpush2.msra.mxu0 0.0
  %1025 = vmatprep.subr.mxu0 0.0
  %1026 = vmatpush2.msra.mxu0 0.0
  %1027 = vmatprep.subr.mxu0 0.0
  %1028 = vmatpush2.msra.mxu0 0.0
  %1029 = vmatprep.subr.mxu0 0.0
  %1030 = vmatpush2.msra.mxu0 0.0
  %1031 = vmatprep.subr.mxu0 0.0
  %1032 = vmatpush2.msra.mxu0 0.0
  %1033 = vmatprep.subr.mxu0 0.0
  %1034 = vmatpush2.msra.mxu0 0.0
  %1035 = vmatprep.subr.mxu0 0.0
  %1036 = vmatpush2.msra.mxu0 0.0
  %1037 = vmatprep.subr.mxu0 0.0
  %1038 = vmatpush2.msra.mxu0 0.0
  %1039 = vmatprep.subr.mxu0 0.0
  %1040 = vmatpush2.msra.mxu0 0.0
  %1041 = vmatprep.subr.mxu0 0.0
  %1042 = vmatpush2.msra.mxu0 0.0
  %1043 = vmatprep.subr.mxu0 0.0
  %1044 = vmatpush2.msra.mxu0 0.0
  %1045 = vmatprep.subr.mxu0 0.0
  %1046 = vmatpush2.msra.mxu0 0.0
  %1047 = vmatprep.subr.mxu0 0.0
  %1048 = vmatpush2.msra.mxu0 0.0
  %1049 = vmatprep.subr.mxu0 0.0
  %1050 = vmatpush2.msra.mxu0 0.0
  %1051 = vmatprep.mubr.f32.mxu0 0.0
  %1052 = vmatmul.mubr.f32.gmra.mxu0 %v805
  %v1053 = vpop.f32.mrf.mxu0
  %v1054 = vadd.f32 0.0, %v1053
  %v1055 = vpop.f32.mrf.mxu0
  %1056 = vdwg.mxu0
  %v1058 = vlaneseq
  %v1059 = vshrl.u32 %v1058, 7
  %v1060 = vsub.s32 0, %v1059
  %v1061 = vrot.slane %v897, %v1060
  %v1064 = vsel %vm66, %v986, 0
  %1066 = vmatprep.subr.mxu0 0.0
  %1067 = vmatpush1.msra.mxu0 0.0
  %1068 = vmatprep.subr.mxu0 0.0
  %1069 = vmatpush1.msra.mxu0 0.0
  %1070 = vmatprep.subr.mxu0 0.0
  %1071 = vmatpush1.msra.mxu0 0.0
  %1072 = vmatprep.subr.mxu0 0.0
  %1073 = vmatpush1.msra.mxu0 0.0
  %1074 = vmatprep.subr.mxu0 0.0
  %1075 = vmatpush1.msra.mxu0 0.0
  %1076 = vmatprep.subr.mxu0 0.0
  %1077 = vmatpush1.msra.mxu0 0.0
  %1078 = vmatprep.subr.mxu0 0.0
  %1079 = vmatpush1.msra.mxu0 0.0
  %1080 = vmatprep.subr.mxu0 0.0
  %1081 = vmatpush1.msra.mxu0 0.0
  %1082 = vmatprep.subr.mxu0 0.0
  %1083 = vmatpush1.msra.mxu0 0.0
  %1084 = vmatprep.subr.mxu0 0.0
  %1085 = vmatpush1.msra.mxu0 0.0
  %1086 = vmatprep.subr.mxu0 0.0
  %1087 = vmatpush1.msra.mxu0 0.0
  %1088 = vmatprep.subr.mxu0 0.0
  %1089 = vmatpush1.msra.mxu0 0.0
  %1090 = vmatprep.subr.mxu0 0.0
  %1091 = vmatpush1.msra.mxu0 0.0
  %1092 = vmatprep.subr.mxu0 0.0
  %1093 = vmatpush1.msra.mxu0 0.0
  %1094 = vmatprep.subr.mxu0 0.0
  %1095 = vmatpush1.msra.mxu0 0.0
  %1096 = vmatprep.subr.mxu0 0.0
  %1097 = vmatpush1.msra.mxu0 %v1054
  %1098 = vmatprep.subr.mxu0 0.0
  %1099 = vmatpush2.msra.mxu0 0.0
  %1100 = vmatprep.subr.mxu0 0.0
  %1101 = vmatpush2.msra.mxu0 0.0
  %1102 = vmatprep.subr.mxu0 0.0
  %1103 = vmatpush2.msra.mxu0 0.0
  %1104 = vmatprep.subr.mxu0 0.0
  %1105 = vmatpush2.msra.mxu0 0.0
  %1106 = vmatprep.subr.mxu0 0.0
  %1107 = vmatpush2.msra.mxu0 0.0
  %1108 = vmatprep.subr.mxu0 0.0
  %1109 = vmatpush2.msra.mxu0 0.0
  %1110 = vmatprep.subr.mxu0 0.0
  %1111 = vmatpush2.msra.mxu0 0.0
  %1112 = vmatprep.subr.mxu0 0.0
  %1113 = vmatpush2.msra.mxu0 0.0
  %1114 = vmatprep.subr.mxu0 0.0
  %1115 = vmatpush2.msra.mxu0 0.0
  %1116 = vmatprep.subr.mxu0 0.0
  %1117 = vmatpush2.msra.mxu0 0.0
  %1118 = vmatprep.subr.mxu0 0.0
  %1119 = vmatpush2.msra.mxu0 0.0
  %1120 = vmatprep.subr.mxu0 0.0
  %1121 = vmatpush2.msra.mxu0 0.0
  %1122 = vmatprep.subr.mxu0 0.0
  %1123 = vmatpush2.msra.mxu0 0.0
  %1124 = vmatprep.subr.mxu0 0.0
  %1125 = vmatpush2.msra.mxu0 0.0
  %1126 = vmatprep.subr.mxu0 0.0
  %1127 = vmatpush2.msra.mxu0 0.0
  %1128 = vmatprep.subr.mxu0 0.0
  %1129 = vmatpush2.msra.mxu0 0.0
  %1130 = vmatprep.mubr.f32.mxu0 0.0
  %1131 = vmatmul.mubr.f32.gmra.mxu0 %v1064
  %v1132 = vpop.f32.mrf.mxu0
  %v1133 = vadd.f32 %v1061, %v1132
  %v1134 = vpop.f32.mrf.mxu0
  %1135 = vdwg.mxu0
  %1136 = vst [vmem:[%s10] sm:$0xff] %v1133
  // Predicated region
  $region42: #{advanced_gcn_forward.1} parent=0 // pred_check
    _
  $region43: #{advanced_gcn_forward.1} parent=0 // pred_check_branch
    %1138 = sbr.rel (0) target = $region45
  $region44: #{advanced_gcn_forward.1} parent=0 // pred_region
    _
  $region45: #{advanced_gcn_forward.1} parent=0 // pred_fallthru
    _
  // Predicated region
  $region46: #{advanced_gcn_forward.1} parent=0 // pred_check
    _
  $region47: #{advanced_gcn_forward.1} parent=0 // pred_check_branch
    %1140 = sbr.rel (0) target = $region49
  $region48: #{advanced_gcn_forward.1} parent=0 // pred_region
    _
  $region49: #{advanced_gcn_forward.1} parent=0 // pred_fallthru
    _

</llo_original>
